<compile_context>
chip_gen: v7x
topology: tpu7x:2x2x1
jax: 0.10.0
libtpu: 0.0.40
codegen_flags: <defaults>
</compile_context>

<pallas_src>
import functools

import jax
import jax.numpy as jnp
from jax import lax
from jax.experimental import pallas as pl
from jax.experimental.pallas import tpu as pltpu

_KEY_PAD_BIAS = -1e9    # additive bias on padded keys (≈ masked_fill(-inf))
_XBATCH_BIAS = -1e30    # additive bias forbidding cross-batch attention in a row slab


def _layernorm(y, gamma, beta, eps=1e-5):
    mean = jnp.mean(y, axis=-1, keepdims=True)
    c = y - mean
    var = jnp.mean(c * c, axis=-1, keepdims=True)
    return c * lax.rsqrt(var + eps) * gamma + beta


def encoder_layer_kernel(
    x_ref,        # (M, D)              M = TB*S rows of this grid step
    bias_ref,     # (1, M, M)           additive attention bias
    wqkv_ref,     # (D, 2*H*dk + H*dv)  fused Q|K|V weights
    bqkv_ref,     # (1, 2*H*dk + H*dv)
    wfc_ref,      # (H*dv, D)
    w1_ref,       # (D, d_ff)
    b1f_ref,      # (1, d_ff)
    w2_ref,       # (d_ff, D)
    vec_ref,      # (8, D) rows: [b_fc, g_attn, b_attn, g1, b1, b_ff2, g2, b2]
    out_ref,      # (M, D)
    *, n_heads, d_k, d_v,
):
    x = x_ref[...]          # (M, D)
    bias = bias_ref[0]      # (M, M)

    b_fc = vec_ref[0:1, :]
    g_a, b_a = vec_ref[1:2, :], vec_ref[2:3, :]
    g_1, b_1 = vec_ref[3:4, :], vec_ref[4:5, :]
    b_f2 = vec_ref[5:6, :]
    g_2, b_2 = vec_ref[6:7, :], vec_ref[7:8, :]

    # --- fused QKV projection: one MXU pass ------------------------------
    qkv = jnp.dot(x, wqkv_ref[...], preferred_element_type=jnp.float32) + bqkv_ref[...]
    Hdk = n_heads * d_k
    scale = 1.0 / (d_k ** 0.5)

    # --- per-head attention, accumulated straight into the fc projection --
    attn_lin = jnp.broadcast_to(b_fc, x.shape)          # hoisted out of the loop
    for h in range(n_heads):
        qh = qkv[:, h * d_k:(h + 1) * d_k]
        kh = qkv[:, Hdk + h * d_k:Hdk + (h + 1) * d_k]
        vh = qkv[:, 2 * Hdk + h * d_v:2 * Hdk + (h + 1) * d_v]

        # scores = qh @ kh^T / sqrt(d_k) + bias   (bias = key-pad + block-diag)
        s = lax.dot_general(qh, kh, (((1,), (1,)), ((), ())),
                            preferred_element_type=jnp.float32) * scale + bias
        s_max = jnp.max(s, axis=-1, keepdims=True)
        e = jnp.exp(s - s_max)
        p = e * pl.reciprocal(jnp.sum(e, axis=-1, keepdims=True), approx=True)

        ctx_h = jnp.dot(p, vh, preferred_element_type=jnp.float32)      # (M, d_v)
        attn_lin = attn_lin + jnp.dot(
            ctx_h, wfc_ref[h * d_v:(h + 1) * d_v, :],
            preferred_element_type=jnp.float32)

    # --- MHA-internal LayerNorm + residual norm1 (dropout = identity) -----
    attn_out = _layernorm(attn_lin + x, g_a, b_a)
    x1 = _layernorm(x + attn_out, g_1, b_1)

    # --- position-wise FFN + residual norm2 --------------------------------
    h1 = jnp.maximum(
        jnp.dot(x1, w1_ref[...], preferred_element_type=jnp.float32) + b1f_ref[...],
        0.0)
    ffn = jnp.dot(h1, w2_ref[...], preferred_element_type=jnp.float32) + b_f2
    out_ref[...] = _layernorm(x1 + ffn, g_2, b_2).astype(out_ref.dtype)


def _pick_batch_block(B, S, target_rows):
    """Largest divisor TB of B such that TB*S <= max(target_rows, S)."""
    best = 1
    for tb in range(1, B + 1):
        if B % tb == 0 and tb * S <= max(target_rows, S):
            best = tb
    return best


def encoder_layer_forward(x, mask, params, *, target_rows=256):
    """x: (B, S, d_model) f32; mask: (B, S), nonzero = attend, 0 = padded key."""
    B, S, D = x.shape
    H, d_k, d_v = params["n_heads"], params["d_k"], params["d_v"]
    d_ff = params["w1"].shape[1]
    Hdk, Hdv = H * d_k, H * d_v

    tb = _pick_batch_block(B, S, target_rows)
    G = B // tb          # grid steps
    M = tb * S           # rows per grid step

    # --- pack parameters (9 inputs instead of 20 -> shorter DMA prologue) ---
    wqkv = jnp.concatenate([params["wq"], params["wk"], params["wv"]], axis=1)
    bqkv = jnp.concatenate([params["bq"], params["bk"], params["bv"]]).reshape(1, -1)
    b1f = params["b1f"].reshape(1, -1)
    vecs = jnp.stack([params["bfc"], params["ga"], params["ba"],
                      params["g1"], params["b1"], params["b2f"],
                      params["g2"], params["b2"]], axis=0).astype(jnp.float32)

    # --- additive attention bias: key padding + block-diagonal structure ----
    # NOTE: a fully padded row degenerates to a uniform distribution over its
    # own batch element's keys (same as the PyTorch reference's softmax of all
    # -inf rows), i.e. it still "attends" uniformly to padding.
    key_bias = jnp.where(mask != 0, 0.0, _KEY_PAD_BIAS).astype(jnp.float32)  # (B, S)
    key_bias = key_bias.reshape(G, 1, M)
    blk = jnp.arange(M) // S
    struct = jnp.where(blk[:, None] == blk[None, :], 0.0, _XBATCH_BIAS)
    attn_bias = (key_bias + struct[None]).astype(jnp.float32)                 # (G, M, M)

    x2d = x.reshape(B * S, D).astype(jnp.float32)

    kern = functools.partial(encoder_layer_kernel, n_heads=H, d_k=d_k, d_v=d_v)

    def const(shape):
        return pl.BlockSpec(shape, lambda g, _n=len(shape): (0,) * _n)

    out = pl.pallas_call(
        kern,
        out_shape=jax.ShapeDtypeStruct((B * S, D), jnp.float32),
        grid=(G,),
        in_specs=[
            pl.BlockSpec((M, D), lambda g: (g, 0)),        # x row slab
            pl.BlockSpec((1, M, M), lambda g: (g, 0, 0)),  # attention bias
            const((D, 2 * Hdk + Hdv)),                     # wqkv
            const((1, 2 * Hdk + Hdv)),                     # bqkv
            const((Hdv, D)),                               # wfc
            const((D, d_ff)),                              # w1
            const((1, d_ff)),                              # b1 (ffn)
            const((d_ff, D)),                              # w2
            const((8, D)),                                 # packed vectors
        ],
        out_specs=pl.BlockSpec((M, D), lambda g: (g, 0)),
        compiler_params=pltpu.CompilerParams(
            dimension_semantics=("parallel",)),
    )(x2d, attn_bias, wqkv, bqkv,
      params["wfc"].astype(jnp.float32),
      params["w1"].astype(jnp.float32), b1f,
      params["w2"].astype(jnp.float32), vecs)

    return out.reshape(B, S, D)


def reference_forward(x, mask, p):
    """Plain-JAX mirror of the PyTorch EncoderLayer.forward (eval mode)."""
    B, S, D = x.shape
    H, d_k, d_v = p["n_heads"], p["d_k"], p["d_v"]

    q = (jnp.matmul(x, p["wq"]) + p["bq"]).reshape(B, S, H, d_k).transpose(0, 2, 1, 3)
    k = (jnp.matmul(x, p["wk"]) + p["bk"]).reshape(B, S, H, d_k).transpose(0, 2, 1, 3)
    v = (jnp.matmul(x, p["wv"]) + p["bv"]).reshape(B, S, H, d_v).transpose(0, 2, 1, 3)

    scores = jnp.einsum("bhqd,bhkd->bhqk", q, k) / (d_k ** 0.5)
    scores = jnp.where(mask[:, None, None, :] == 0, -1e30, scores)
    attn = jax.nn.softmax(scores, axis=-1)
    ctx = jnp.einsum("bhqk,bhkd->bhqd", attn, v).transpose(0, 2, 1, 3)
    ctx = ctx.reshape(B, S, H * d_v)
    out = jnp.matmul(ctx, p["wfc"]) + p["bfc"]

    def ln(y, g, b):
        mu = jnp.mean(y, axis=-1, keepdims=True)
        var = jnp.mean((y - mu) ** 2, axis=-1, keepdims=True)
        return (y - mu) * lax.rsqrt(var + 1e-5) * g + b

    attn_out = ln(out + x, p["ga"], p["ba"])
    x1 = ln(x + attn_out, p["g1"], p["b1"])
    h1 = jnp.maximum(jnp.matmul(x1, p["w1"]) + p["b1f"], 0.0)
    ffn = jnp.matmul(h1, p["w2"]) + p["b2f"]
    return ln(x1 + ffn, p["g2"], p["b2"])


if __name__ == "__main__":
    B, S = 2, 8
    d_model, n_heads, d_k, d_v, d_ff = 128, 4, 32, 32, 256

    key = jax.random.PRNGKey(0)
    keys = jax.random.split(key, 18)
    sc = 0.05

    params = {
        "n_heads": n_heads, "d_k": d_k, "d_v": d_v,
        "wq": sc * jax.random.normal(keys[0], (d_model, n_heads * d_k), jnp.float32),
        "bq": sc * jax.random.normal(keys[1], (n_heads * d_k,), jnp.float32),
        "wk": sc * jax.random.normal(keys[2], (d_model, n_heads * d_k), jnp.float32),
        "bk": sc * jax.random.normal(keys[3], (n_heads * d_k,), jnp.float32),
        "wv": sc * jax.random.normal(keys[4], (d_model, n_heads * d_v), jnp.float32),
        "bv": sc * jax.random.normal(keys[5], (n_heads * d_v,), jnp.float32),
        "wfc": sc * jax.random.normal(keys[6], (n_heads * d_v, d_model), jnp.float32),
        "bfc": sc * jax.random.normal(keys[7], (d_model,), jnp.float32),
        "ga": 1.0 + sc * jax.random.normal(keys[8], (d_model,), jnp.float32),
        "ba": sc * jax.random.normal(keys[9], (d_model,), jnp.float32),
        "g1": 1.0 + sc * jax.random.normal(keys[10], (d_model,), jnp.float32),
        "b1": sc * jax.random.normal(keys[11], (d_model,), jnp.float32),
        "w1": sc * jax.random.normal(keys[12], (d_model, d_ff), jnp.float32),
        "b1f": sc * jax.random.normal(keys[13], (d_ff,), jnp.float32),
        "w2": sc * jax.random.normal(keys[14], (d_ff, d_model), jnp.float32),
        "b2f": sc * jax.random.normal(keys[15], (d_model,), jnp.float32),
        "g2": jnp.ones((d_model,), jnp.float32),
        "b2": jnp.zeros((d_model,), jnp.float32),
    }

    x = jax.random.normal(keys[16], (B, S, d_model), jnp.float32)
    mask = jnp.ones((B, S), jnp.float32)
    mask = mask.at[1, 6:].set(0.0)   # pad out the last 2 keys of batch 1

    out = jax.block_until_ready(encoder_layer_forward(x, mask, params))
    ref = reference_forward(x, mask, params)

    assert out.shape == (B, S, d_model)
    assert bool(jnp.all(jnp.isfinite(out)))
    # Tolerance covers default TPU MXU matmul precision (bf16 operand passes,
    # f32 accumulation) and the EUP approximate reciprocal in the softmax.
    max_err = float(jnp.max(jnp.abs(out - ref)))
    assert jnp.allclose(out, ref, atol=5e-3, rtol=5e-3), max_err

    print("KERNEL_OK")
</pallas_src>

<mosaic_0001>
module attributes {stable_mosaic.version = 11 : i64} {
  func.func @encoder_layer_kernel(%arg0: i32, %arg1: memref<16x128xf32, #tpu.memory_space<vmem>>, %arg2: memref<1x16x16xf32, #tpu.memory_space<vmem>>, %arg3: memref<128x384xf32, #tpu.memory_space<vmem>>, %arg4: memref<1x384xf32, #tpu.memory_space<vmem>>, %arg5: memref<128x128xf32, #tpu.memory_space<vmem>>, %arg6: memref<128x256xf32, #tpu.memory_space<vmem>>, %arg7: memref<1x256xf32, #tpu.memory_space<vmem>>, %arg8: memref<256x128xf32, #tpu.memory_space<vmem>>, %arg9: memref<8x128xf32, #tpu.memory_space<vmem>>, %arg10: memref<16x128xf32, #tpu.memory_space<vmem>>) attributes {dimension_semantics = [#tpu.dimension_semantics<parallel>], iteration_bounds = array<i64: 1>, scalar_prefetch = 0 : i64, scratch_operands = 0 : i64, tpu.core_type = #tpu.core_type<tc>, window_params = [{transform_indices = @transform_0, window_bounds = array<i64: 16, 128>}, {transform_indices = @transform_1, window_bounds = array<i64: 1, 16, 16>}, {pipeline_mode = #tpu.pipeline_mode<synchronous>, transform_indices = @transform_2, window_bounds = array<i64: 128, 384>}, {pipeline_mode = #tpu.pipeline_mode<synchronous>, transform_indices = @transform_3, window_bounds = array<i64: 1, 384>}, {pipeline_mode = #tpu.pipeline_mode<synchronous>, transform_indices = @transform_4, window_bounds = array<i64: 128, 128>}, {pipeline_mode = #tpu.pipeline_mode<synchronous>, transform_indices = @transform_5, window_bounds = array<i64: 128, 256>}, {pipeline_mode = #tpu.pipeline_mode<synchronous>, transform_indices = @transform_6, window_bounds = array<i64: 1, 256>}, {pipeline_mode = #tpu.pipeline_mode<synchronous>, transform_indices = @transform_7, window_bounds = array<i64: 256, 128>}, {pipeline_mode = #tpu.pipeline_mode<synchronous>, transform_indices = @transform_8, window_bounds = array<i64: 8, 128>}, {transform_indices = @transform_9, window_bounds = array<i64: 16, 128>}]} {
    %c0 = arith.constant 0 : index
    %c0_0 = arith.constant 0 : index
    %0 = vector.load %arg1[%c0, %c0_0] : memref<16x128xf32, #tpu.memory_space<vmem>>, vector<16x128xf32>
    %c0_1 = arith.constant 0 : index
    %c0_2 = arith.constant 0 : index
    %c0_3 = arith.constant 0 : index
    %1 = vector.load %arg2[%c0_1, %c0_2, %c0_3] : memref<1x16x16xf32, #tpu.memory_space<vmem>>, vector<1x16x16xf32>
    %2 = vector.shape_cast %1 : vector<1x16x16xf32> to vector<16x16xf32>
    %c0_4 = arith.constant 0 : index
    %c0_5 = arith.constant 0 : index
    %3 = vector.load %arg9[%c0_4, %c0_5] : memref<8x128xf32, #tpu.memory_space<vmem>>, vector<1x128xf32>
    %c1 = arith.constant 1 : index
    %c0_6 = arith.constant 0 : index
    %4 = vector.load %arg9[%c1, %c0_6] : memref<8x128xf32, #tpu.memory_space<vmem>>, vector<1x128xf32>
    %c2 = arith.constant 2 : index
    %c0_7 = arith.constant 0 : index
    %5 = vector.load %arg9[%c2, %c0_7] : memref<8x128xf32, #tpu.memory_space<vmem>>, vector<1x128xf32>
    %c3 = arith.constant 3 : index
    %c0_8 = arith.constant 0 : index
    %6 = vector.load %arg9[%c3, %c0_8] : memref<8x128xf32, #tpu.memory_space<vmem>>, vector<1x128xf32>
    %c4 = arith.constant 4 : index
    %c0_9 = arith.constant 0 : index
    %7 = vector.load %arg9[%c4, %c0_9] : memref<8x128xf32, #tpu.memory_space<vmem>>, vector<1x128xf32>
    %c5 = arith.constant 5 : index
    %c0_10 = arith.constant 0 : index
    %8 = vector.load %arg9[%c5, %c0_10] : memref<8x128xf32, #tpu.memory_space<vmem>>, vector<1x128xf32>
    %c6 = arith.constant 6 : index
    %c0_11 = arith.constant 0 : index
    %9 = vector.load %arg9[%c6, %c0_11] : memref<8x128xf32, #tpu.memory_space<vmem>>, vector<1x128xf32>
    %c7 = arith.constant 7 : index
    %c0_12 = arith.constant 0 : index
    %10 = vector.load %arg9[%c7, %c0_12] : memref<8x128xf32, #tpu.memory_space<vmem>>, vector<1x128xf32>
    %c0_13 = arith.constant 0 : index
    %c0_14 = arith.constant 0 : index
    %11 = vector.load %arg3[%c0_13, %c0_14] : memref<128x384xf32, #tpu.memory_space<vmem>>, vector<128x384xf32>
    %cst = arith.constant dense<0.000000e+00> : vector<16x384xf32>
    %12 = tpu.matmul %0, %11, %cst {dimension_numbers = #tpu.dot_dimension_numbers<[1], [0], [0], [1], [0, 0, 1, 1], [], []>} : vector<16x128xf32>, vector<128x384xf32>, vector<16x384xf32> -> vector<16x384xf32>
    %c0_15 = arith.constant 0 : index
    %c0_16 = arith.constant 0 : index
    %13 = vector.load %arg4[%c0_15, %c0_16] : memref<1x384xf32, #tpu.memory_space<vmem>>, vector<1x384xf32>
    %14 = vector.broadcast %13 : vector<1x384xf32> to vector<16x384xf32>
    %15 = arith.addf %12, %14 : vector<16x384xf32>
    %16 = vector.shape_cast %3 : vector<1x128xf32> to vector<1x128xf32>
    %17 = vector.broadcast %16 : vector<1x128xf32> to vector<16x128xf32>
    %18 = vector.extract_strided_slice %15 {offsets = [0, 0], sizes = [16, 32], strides = [1, 1]} : vector<16x384xf32> to vector<16x32xf32>
    %19 = vector.extract_strided_slice %15 {offsets = [0, 128], sizes = [16, 32], strides = [1, 1]} : vector<16x384xf32> to vector<16x32xf32>
    %20 = vector.extract_strided_slice %15 {offsets = [0, 256], sizes = [16, 32], strides = [1, 1]} : vector<16x384xf32> to vector<16x32xf32>
    %cst_17 = arith.constant dense<0.000000e+00> : vector<16x16xf32>
    %21 = tpu.matmul %18, %19, %cst_17 {dimension_numbers = #tpu.dot_dimension_numbers<[1], [1], [0], [0], [0, 0, 1, 0], [], []>} : vector<16x32xf32>, vector<16x32xf32>, vector<16x16xf32> -> vector<16x16xf32>
    %cst_18 = arith.constant 0.176776692 : f32
    %22 = vector.broadcast %cst_18 : f32 to vector<16x16xf32>
    %23 = arith.mulf %21, %22 : vector<16x16xf32>
    %24 = arith.addf %23, %2 : vector<16x16xf32>
    %cst_19 = arith.constant dense<0xFF800000> : vector<16xf32>
    %25 = vector.multi_reduction <maximumf>, %24, %cst_19 [1] : vector<16x16xf32> to vector<16xf32>
    %26 = vector.shape_cast %25 : vector<16xf32> to vector<16x1xf32>
    %27 = vector.broadcast %26 : vector<16x1xf32> to vector<16x16xf32>
    %28 = arith.subf %24, %27 : vector<16x16xf32>
    %29 = math.exp %28 : vector<16x16xf32>
    %cst_20 = arith.constant dense<0.000000e+00> : vector<16xf32>
    %30 = vector.multi_reduction <add>, %29, %cst_20 [1] : vector<16x16xf32> to vector<16xf32>
    %31 = vector.shape_cast %30 : vector<16xf32> to vector<16x1xf32>
    %32 = tpu.reciprocal %31 {approx = true} : vector<16x1xf32> -> vector<16x1xf32>
    %33 = vector.broadcast %32 : vector<16x1xf32> to vector<16x16xf32>
    %34 = arith.mulf %29, %33 : vector<16x16xf32>
    %cst_21 = arith.constant dense<0.000000e+00> : vector<16x32xf32>
    %35 = tpu.matmul %34, %20, %cst_21 {dimension_numbers = #tpu.dot_dimension_numbers<[1], [0], [0], [1], [0, 0, 1, 1], [], []>} : vector<16x16xf32>, vector<16x32xf32>, vector<16x32xf32> -> vector<16x32xf32>
    %c0_22 = arith.constant 0 : index
    %c0_23 = arith.constant 0 : index
    %36 = vector.load %arg5[%c0_22, %c0_23] : memref<128x128xf32, #tpu.memory_space<vmem>>, vector<32x128xf32>
    %cst_24 = arith.constant dense<0.000000e+00> : vector<16x128xf32>
    %37 = tpu.matmul %35, %36, %cst_24 {dimension_numbers = #tpu.dot_dimension_numbers<[1], [0], [0], [1], [0, 0, 1, 1], [], []>} : vector<16x32xf32>, vector<32x128xf32>, vector<16x128xf32> -> vector<16x128xf32>
    %38 = arith.addf %17, %37 : vector<16x128xf32>
    %39 = vector.extract_strided_slice %15 {offsets = [0, 32], sizes = [16, 32], strides = [1, 1]} : vector<16x384xf32> to vector<16x32xf32>
    %40 = vector.extract_strided_slice %15 {offsets = [0, 160], sizes = [16, 32], strides = [1, 1]} : vector<16x384xf32> to vector<16x32xf32>
    %41 = vector.extract_strided_slice %15 {offsets = [0, 288], sizes = [16, 32], strides = [1, 1]} : vector<16x384xf32> to vector<16x32xf32>
    %cst_25 = arith.constant dense<0.000000e+00> : vector<16x16xf32>
    %42 = tpu.matmul %39, %40, %cst_25 {dimension_numbers = #tpu.dot_dimension_numbers<[1], [1], [0], [0], [0, 0, 1, 0], [], []>} : vector<16x32xf32>, vector<16x32xf32>, vector<16x16xf32> -> vector<16x16xf32>
    %cst_26 = arith.constant 0.176776692 : f32
    %43 = vector.broadcast %cst_26 : f32 to vector<16x16xf32>
    %44 = arith.mulf %42, %43 : vector<16x16xf32>
    %45 = arith.addf %44, %2 : vector<16x16xf32>
    %cst_27 = arith.constant dense<0xFF800000> : vector<16xf32>
    %46 = vector.multi_reduction <maximumf>, %45, %cst_27 [1] : vector<16x16xf32> to vector<16xf32>
    %47 = vector.shape_cast %46 : vector<16xf32> to vector<16x1xf32>
    %48 = vector.broadcast %47 : vector<16x1xf32> to vector<16x16xf32>
    %49 = arith.subf %45, %48 : vector<16x16xf32>
    %50 = math.exp %49 : vector<16x16xf32>
    %cst_28 = arith.constant dense<0.000000e+00> : vector<16xf32>
    %51 = vector.multi_reduction <add>, %50, %cst_28 [1] : vector<16x16xf32> to vector<16xf32>
    %52 = vector.shape_cast %51 : vector<16xf32> to vector<16x1xf32>
    %53 = tpu.reciprocal %52 {approx = true} : vector<16x1xf32> -> vector<16x1xf32>
    %54 = vector.broadcast %53 : vector<16x1xf32> to vector<16x16xf32>
    %55 = arith.mulf %50, %54 : vector<16x16xf32>
    %cst_29 = arith.constant dense<0.000000e+00> : vector<16x32xf32>
    %56 = tpu.matmul %55, %41, %cst_29 {dimension_numbers = #tpu.dot_dimension_numbers<[1], [0], [0], [1], [0, 0, 1, 1], [], []>} : vector<16x16xf32>, vector<16x32xf32>, vector<16x32xf32> -> vector<16x32xf32>
    %c32 = arith.constant 32 : index
    %c0_30 = arith.constant 0 : index
    %57 = vector.load %arg5[%c32, %c0_30] : memref<128x128xf32, #tpu.memory_space<vmem>>, vector<32x128xf32>
    %cst_31 = arith.constant dense<0.000000e+00> : vector<16x128xf32>
    %58 = tpu.matmul %56, %57, %cst_31 {dimension_numbers = #tpu.dot_dimension_numbers<[1], [0], [0], [1], [0, 0, 1, 1], [], []>} : vector<16x32xf32>, vector<32x128xf32>, vector<16x128xf32> -> vector<16x128xf32>
    %59 = arith.addf %38, %58 : vector<16x128xf32>
    %60 = vector.extract_strided_slice %15 {offsets = [0, 64], sizes = [16, 32], strides = [1, 1]} : vector<16x384xf32> to vector<16x32xf32>
    %61 = vector.extract_strided_slice %15 {offsets = [0, 192], sizes = [16, 32], strides = [1, 1]} : vector<16x384xf32> to vector<16x32xf32>
    %62 = vector.extract_strided_slice %15 {offsets = [0, 320], sizes = [16, 32], strides = [1, 1]} : vector<16x384xf32> to vector<16x32xf32>
    %cst_32 = arith.constant dense<0.000000e+00> : vector<16x16xf32>
    %63 = tpu.matmul %60, %61, %cst_32 {dimension_numbers = #tpu.dot_dimension_numbers<[1], [1], [0], [0], [0, 0, 1, 0], [], []>} : vector<16x32xf32>, vector<16x32xf32>, vector<16x16xf32> -> vector<16x16xf32>
    %cst_33 = arith.constant 0.176776692 : f32
    %64 = vector.broadcast %cst_33 : f32 to vector<16x16xf32>
    %65 = arith.mulf %63, %64 : vector<16x16xf32>
    %66 = arith.addf %65, %2 : vector<16x16xf32>
    %cst_34 = arith.constant dense<0xFF800000> : vector<16xf32>
    %67 = vector.multi_reduction <maximumf>, %66, %cst_34 [1] : vector<16x16xf32> to vector<16xf32>
    %68 = vector.shape_cast %67 : vector<16xf32> to vector<16x1xf32>
    %69 = vector.broadcast %68 : vector<16x1xf32> to vector<16x16xf32>
    %70 = arith.subf %66, %69 : vector<16x16xf32>
    %71 = math.exp %70 : vector<16x16xf32>
    %cst_35 = arith.constant dense<0.000000e+00> : vector<16xf32>
    %72 = vector.multi_reduction <add>, %71, %cst_35 [1] : vector<16x16xf32> to vector<16xf32>
    %73 = vector.shape_cast %72 : vector<16xf32> to vector<16x1xf32>
    %74 = tpu.reciprocal %73 {approx = true} : vector<16x1xf32> -> vector<16x1xf32>
    %75 = vector.broadcast %74 : vector<16x1xf32> to vector<16x16xf32>
    %76 = arith.mulf %71, %75 : vector<16x16xf32>
    %cst_36 = arith.constant dense<0.000000e+00> : vector<16x32xf32>
    %77 = tpu.matmul %76, %62, %cst_36 {dimension_numbers = #tpu.dot_dimension_numbers<[1], [0], [0], [1], [0, 0, 1, 1], [], []>} : vector<16x16xf32>, vector<16x32xf32>, vector<16x32xf32> -> vector<16x32xf32>
    %c64 = arith.constant 64 : index
    %c0_37 = arith.constant 0 : index
    %78 = vector.load %arg5[%c64, %c0_37] : memref<128x128xf32, #tpu.memory_space<vmem>>, vector<32x128xf32>
    %cst_38 = arith.constant dense<0.000000e+00> : vector<16x128xf32>
    %79 = tpu.matmul %77, %78, %cst_38 {dimension_numbers = #tpu.dot_dimension_numbers<[1], [0], [0], [1], [0, 0, 1, 1], [], []>} : vector<16x32xf32>, vector<32x128xf32>, vector<16x128xf32> -> vector<16x128xf32>
    %80 = arith.addf %59, %79 : vector<16x128xf32>
    %81 = vector.extract_strided_slice %15 {offsets = [0, 96], sizes = [16, 32], strides = [1, 1]} : vector<16x384xf32> to vector<16x32xf32>
    %82 = vector.extract_strided_slice %15 {offsets = [0, 224], sizes = [16, 32], strides = [1, 1]} : vector<16x384xf32> to vector<16x32xf32>
    %83 = vector.extract_strided_slice %15 {offsets = [0, 352], sizes = [16, 32], strides = [1, 1]} : vector<16x384xf32> to vector<16x32xf32>
    %cst_39 = arith.constant dense<0.000000e+00> : vector<16x16xf32>
    %84 = tpu.matmul %81, %82, %cst_39 {dimension_numbers = #tpu.dot_dimension_numbers<[1], [1], [0], [0], [0, 0, 1, 0], [], []>} : vector<16x32xf32>, vector<16x32xf32>, vector<16x16xf32> -> vector<16x16xf32>
    %cst_40 = arith.constant 0.176776692 : f32
    %85 = vector.broadcast %cst_40 : f32 to vector<16x16xf32>
    %86 = arith.mulf %84, %85 : vector<16x16xf32>
    %87 = arith.addf %86, %2 : vector<16x16xf32>
    %cst_41 = arith.constant dense<0xFF800000> : vector<16xf32>
    %88 = vector.multi_reduction <maximumf>, %87, %cst_41 [1] : vector<16x16xf32> to vector<16xf32>
    %89 = vector.shape_cast %88 : vector<16xf32> to vector<16x1xf32>
    %90 = vector.broadcast %89 : vector<16x1xf32> to vector<16x16xf32>
    %91 = arith.subf %87, %90 : vector<16x16xf32>
    %92 = math.exp %91 : vector<16x16xf32>
    %cst_42 = arith.constant dense<0.000000e+00> : vector<16xf32>
    %93 = vector.multi_reduction <add>, %92, %cst_42 [1] : vector<16x16xf32> to vector<16xf32>
    %94 = vector.shape_cast %93 : vector<16xf32> to vector<16x1xf32>
    %95 = tpu.reciprocal %94 {approx = true} : vector<16x1xf32> -> vector<16x1xf32>
    %96 = vector.broadcast %95 : vector<16x1xf32> to vector<16x16xf32>
    %97 = arith.mulf %92, %96 : vector<16x16xf32>
    %cst_43 = arith.constant dense<0.000000e+00> : vector<16x32xf32>
    %98 = tpu.matmul %97, %83, %cst_43 {dimension_numbers = #tpu.dot_dimension_numbers<[1], [0], [0], [1], [0, 0, 1, 1], [], []>} : vector<16x16xf32>, vector<16x32xf32>, vector<16x32xf32> -> vector<16x32xf32>
    %c96 = arith.constant 96 : index
    %c0_44 = arith.constant 0 : index
    %99 = vector.load %arg5[%c96, %c0_44] : memref<128x128xf32, #tpu.memory_space<vmem>>, vector<32x128xf32>
    %cst_45 = arith.constant dense<0.000000e+00> : vector<16x128xf32>
    %100 = tpu.matmul %98, %99, %cst_45 {dimension_numbers = #tpu.dot_dimension_numbers<[1], [0], [0], [1], [0, 0, 1, 1], [], []>} : vector<16x32xf32>, vector<32x128xf32>, vector<16x128xf32> -> vector<16x128xf32>
    %101 = arith.addf %80, %100 : vector<16x128xf32>
    %102 = arith.addf %101, %0 : vector<16x128xf32>
    %cst_46 = arith.constant dense<0.000000e+00> : vector<16xf32>
    %103 = vector.multi_reduction <add>, %102, %cst_46 [1] : vector<16x128xf32> to vector<16xf32>
    %104 = vector.shape_cast %103 : vector<16xf32> to vector<16x1xf32>
    %cst_47 = arith.constant 1.280000e+02 : f32
    %105 = vector.broadcast %cst_47 : f32 to vector<16x1xf32>
    %106 = arith.divf %104, %105 : vector<16x1xf32>
    %107 = vector.broadcast %106 : vector<16x1xf32> to vector<16x128xf32>
    %108 = arith.subf %102, %107 : vector<16x128xf32>
    %109 = arith.mulf %108, %108 : vector<16x128xf32>
    %cst_48 = arith.constant dense<0.000000e+00> : vector<16xf32>
    %110 = vector.multi_reduction <add>, %109, %cst_48 [1] : vector<16x128xf32> to vector<16xf32>
    %111 = vector.shape_cast %110 : vector<16xf32> to vector<16x1xf32>
    %cst_49 = arith.constant 1.280000e+02 : f32
    %112 = vector.broadcast %cst_49 : f32 to vector<16x1xf32>
    %113 = arith.divf %111, %112 : vector<16x1xf32>
    %cst_50 = arith.constant 9.99999974E-6 : f32
    %114 = vector.broadcast %cst_50 : f32 to vector<16x1xf32>
    %115 = arith.addf %113, %114 : vector<16x1xf32>
    %116 = math.rsqrt %115 : vector<16x1xf32>
    %117 = vector.broadcast %116 : vector<16x1xf32> to vector<16x128xf32>
    %118 = arith.mulf %108, %117 : vector<16x128xf32>
    %119 = vector.broadcast %4 : vector<1x128xf32> to vector<16x128xf32>
    %120 = arith.mulf %118, %119 : vector<16x128xf32>
    %121 = vector.broadcast %5 : vector<1x128xf32> to vector<16x128xf32>
    %122 = arith.addf %120, %121 : vector<16x128xf32>
    %123 = arith.addf %0, %122 : vector<16x128xf32>
    %cst_51 = arith.constant dense<0.000000e+00> : vector<16xf32>
    %124 = vector.multi_reduction <add>, %123, %cst_51 [1] : vector<16x128xf32> to vector<16xf32>
    %125 = vector.shape_cast %124 : vector<16xf32> to vector<16x1xf32>
    %cst_52 = arith.constant 1.280000e+02 : f32
    %126 = vector.broadcast %cst_52 : f32 to vector<16x1xf32>
    %127 = arith.divf %125, %126 : vector<16x1xf32>
    %128 = vector.broadcast %127 : vector<16x1xf32> to vector<16x128xf32>
    %129 = arith.subf %123, %128 : vector<16x128xf32>
    %130 = arith.mulf %129, %129 : vector<16x128xf32>
    %cst_53 = arith.constant dense<0.000000e+00> : vector<16xf32>
    %131 = vector.multi_reduction <add>, %130, %cst_53 [1] : vector<16x128xf32> to vector<16xf32>
    %132 = vector.shape_cast %131 : vector<16xf32> to vector<16x1xf32>
    %cst_54 = arith.constant 1.280000e+02 : f32
    %133 = vector.broadcast %cst_54 : f32 to vector<16x1xf32>
    %134 = arith.divf %132, %133 : vector<16x1xf32>
    %cst_55 = arith.constant 9.99999974E-6 : f32
    %135 = vector.broadcast %cst_55 : f32 to vector<16x1xf32>
    %136 = arith.addf %134, %135 : vector<16x1xf32>
    %137 = math.rsqrt %136 : vector<16x1xf32>
    %138 = vector.broadcast %137 : vector<16x1xf32> to vector<16x128xf32>
    %139 = arith.mulf %129, %138 : vector<16x128xf32>
    %140 = vector.broadcast %6 : vector<1x128xf32> to vector<16x128xf32>
    %141 = arith.mulf %139, %140 : vector<16x128xf32>
    %142 = vector.broadcast %7 : vector<1x128xf32> to vector<16x128xf32>
    %143 = arith.addf %141, %142 : vector<16x128xf32>
    %c0_56 = arith.constant 0 : index
    %c0_57 = arith.constant 0 : index
    %144 = vector.load %arg6[%c0_56, %c0_57] : memref<128x256xf32, #tpu.memory_space<vmem>>, vector<128x256xf32>
    %cst_58 = arith.constant dense<0.000000e+00> : vector<16x256xf32>
    %145 = tpu.matmul %143, %144, %cst_58 {dimension_numbers = #tpu.dot_dimension_numbers<[1], [0], [0], [1], [0, 0, 1, 1], [], []>} : vector<16x128xf32>, vector<128x256xf32>, vector<16x256xf32> -> vector<16x256xf32>
    %c0_59 = arith.constant 0 : index
    %c0_60 = arith.constant 0 : index
    %146 = vector.load %arg7[%c0_59, %c0_60] : memref<1x256xf32, #tpu.memory_space<vmem>>, vector<1x256xf32>
    %147 = vector.broadcast %146 : vector<1x256xf32> to vector<16x256xf32>
    %148 = arith.addf %145, %147 : vector<16x256xf32>
    %cst_61 = arith.constant 0.000000e+00 : f32
    %149 = vector.broadcast %cst_61 : f32 to vector<16x256xf32>
    %150 = arith.maximumf %148, %149 : vector<16x256xf32>
    %c0_62 = arith.constant 0 : index
    %c0_63 = arith.constant 0 : index
    %151 = vector.load %arg8[%c0_62, %c0_63] : memref<256x128xf32, #tpu.memory_space<vmem>>, vector<256x128xf32>
    %cst_64 = arith.constant dense<0.000000e+00> : vector<16x128xf32>
    %152 = tpu.matmul %150, %151, %cst_64 {dimension_numbers = #tpu.dot_dimension_numbers<[1], [0], [0], [1], [0, 0, 1, 1], [], []>} : vector<16x256xf32>, vector<256x128xf32>, vector<16x128xf32> -> vector<16x128xf32>
    %153 = vector.broadcast %8 : vector<1x128xf32> to vector<16x128xf32>
    %154 = arith.addf %152, %153 : vector<16x128xf32>
    %155 = arith.addf %143, %154 : vector<16x128xf32>
    %cst_65 = arith.constant dense<0.000000e+00> : vector<16xf32>
    %156 = vector.multi_reduction <add>, %155, %cst_65 [1] : vector<16x128xf32> to vector<16xf32>
    %157 = vector.shape_cast %156 : vector<16xf32> to vector<16x1xf32>
    %cst_66 = arith.constant 1.280000e+02 : f32
    %158 = vector.broadcast %cst_66 : f32 to vector<16x1xf32>
    %159 = arith.divf %157, %158 : vector<16x1xf32>
    %160 = vector.broadcast %159 : vector<16x1xf32> to vector<16x128xf32>
    %161 = arith.subf %155, %160 : vector<16x128xf32>
    %162 = arith.mulf %161, %161 : vector<16x128xf32>
    %cst_67 = arith.constant dense<0.000000e+00> : vector<16xf32>
    %163 = vector.multi_reduction <add>, %162, %cst_67 [1] : vector<16x128xf32> to vector<16xf32>
    %164 = vector.shape_cast %163 : vector<16xf32> to vector<16x1xf32>
    %cst_68 = arith.constant 1.280000e+02 : f32
    %165 = vector.broadcast %cst_68 : f32 to vector<16x1xf32>
    %166 = arith.divf %164, %165 : vector<16x1xf32>
    %cst_69 = arith.constant 9.99999974E-6 : f32
    %167 = vector.broadcast %cst_69 : f32 to vector<16x1xf32>
    %168 = arith.addf %166, %167 : vector<16x1xf32>
    %169 = math.rsqrt %168 : vector<16x1xf32>
    %170 = vector.broadcast %169 : vector<16x1xf32> to vector<16x128xf32>
    %171 = arith.mulf %161, %170 : vector<16x128xf32>
    %172 = vector.broadcast %9 : vector<1x128xf32> to vector<16x128xf32>
    %173 = arith.mulf %171, %172 : vector<16x128xf32>
    %174 = vector.broadcast %10 : vector<1x128xf32> to vector<16x128xf32>
    %175 = arith.addf %173, %174 : vector<16x128xf32>
    %c0_70 = arith.constant 0 : index
    %c0_71 = arith.constant 0 : index
    %176 = vector.load %arg10[%c0_70, %c0_71] : memref<16x128xf32, #tpu.memory_space<vmem>>, vector<16x128xf32>
    tpu.vector_store %arg10[%c0_70, %c0_71], %175 {strides = array<i32>} : memref<16x128xf32, #tpu.memory_space<vmem>>, vector<16x128xf32>,
    return
  }
  func.func @transform_0(%arg0: i32) -> (i32, i32) {
    %c0_i32 = arith.constant 0 : i32
    %c0_i32_0 = arith.constant 0 : i32
    return %arg0, %c0_i32 : i32, i32
  }
  func.func @transform_1(%arg0: i32) -> (i32, i32, i32) {
    %c0_i32 = arith.constant 0 : i32
    %c0_i32_0 = arith.constant 0 : i32
    %c0_i32_1 = arith.constant 0 : i32
    return %arg0, %c0_i32, %c0_i32_0 : i32, i32, i32
  }
  func.func @transform_2(%arg0: i32) -> (i32, i32) {
    %c0_i32 = arith.constant 0 : i32
    %c0_i32_0 = arith.constant 0 : i32
    %c0_i32_1 = arith.constant 0 : i32
    return %c0_i32, %c0_i32_0 : i32, i32
  }
  func.func @transform_3(%arg0: i32) -> (i32, i32) {
    %c0_i32 = arith.constant 0 : i32
    %c0_i32_0 = arith.constant 0 : i32
    %c0_i32_1 = arith.constant 0 : i32
    return %c0_i32, %c0_i32_0 : i32, i32
  }
  func.func @transform_4(%arg0: i32) -> (i32, i32) {
    %c0_i32 = arith.constant 0 : i32
    %c0_i32_0 = arith.constant 0 : i32
    %c0_i32_1 = arith.constant 0 : i32
    return %c0_i32, %c0_i32_0 : i32, i32
  }
  func.func @transform_5(%arg0: i32) -> (i32, i32) {
    %c0_i32 = arith.constant 0 : i32
    %c0_i32_0 = arith.constant 0 : i32
    %c0_i32_1 = arith.constant 0 : i32
    return %c0_i32, %c0_i32_0 : i32, i32
  }
  func.func @transform_6(%arg0: i32) -> (i32, i32) {
    %c0_i32 = arith.constant 0 : i32
    %c0_i32_0 = arith.constant 0 : i32
    %c0_i32_1 = arith.constant 0 : i32
    return %c0_i32, %c0_i32_0 : i32, i32
  }
  func.func @transform_7(%arg0: i32) -> (i32, i32) {
    %c0_i32 = arith.constant 0 : i32
    %c0_i32_0 = arith.constant 0 : i32
    %c0_i32_1 = arith.constant 0 : i32
    return %c0_i32, %c0_i32_0 : i32, i32
  }
  func.func @transform_8(%arg0: i32) -> (i32, i32) {
    %c0_i32 = arith.constant 0 : i32
    %c0_i32_0 = arith.constant 0 : i32
    %c0_i32_1 = arith.constant 0 : i32
    return %c0_i32, %c0_i32_0 : i32, i32
  }
  func.func @transform_9(%arg0: i32) -> (i32, i32) {
    %c0_i32 = arith.constant 0 : i32
    %c0_i32_0 = arith.constant 0 : i32
    return %arg0, %c0_i32 : i32, i32
  }
}

</mosaic_0001>

<llo_original>
// kernel: tpu_custom_call.1
$region0: #{tpu_custom_call.1}
  #allocation0 [shape = 'u32[]', space=smem, size = 0x4, offset = 0x4, fixed_abs, tag = 'smem constant byte address 0x4 - core index']
  #allocation1 [shape = 'u32[144,128]{1,0:T(1,128)}', space=vmem, size = 0x12000, scoped, tag = 'internal scratch']
  %s0 = inlined_call_operand.hbm [shape: f32[16,128], index: 0, kind: input, shape index: {}]
  %s1 = inlined_call_operand.hbm [shape: f32[1,16,16], index: 1, kind: input, shape index: {}]
  %s2 = inlined_call_operand.hbm [shape: f32[128,384], index: 2, kind: input, shape index: {}]
  %s3 = inlined_call_operand.vmem [shape: f32[1,384], index: 3, kind: input, shape index: {}]
  %s4 = inlined_call_operand.hbm [shape: f32[128,128], index: 4, kind: input, shape index: {}]
  %s5 = inlined_call_operand.hbm [shape: f32[128,256], index: 5, kind: input, shape index: {}]
  %s6 = inlined_call_operand.vmem [shape: f32[1,256], index: 6, kind: input, shape index: {}]
  %s7 = inlined_call_operand.hbm [shape: f32[256,128], index: 7, kind: input, shape index: {}]
  %s8 = inlined_call_operand.vmem [shape: f32[8,128], index: 8, kind: input, shape index: {}]
  %s9 = inlined_call_operand.hbm [shape: f32[16,128], index: 9, kind: output, shape index: {}]
  %s10 = sld [smem:[#allocation0]]
  $region70: #{tpu_custom_call.1} parent=0
    _
  %s12 = ssub.s32 1, %s10
  %s13 = scalar_select 0, %s12, %s10
  $region1: #{tpu_custom_call.1} parent=0
    #allocation2 [shape = 'u8[8192]{0}', space=vmem, size = 0x2000, scoped, tag = 'input window, operand 0, single buffered']
    #allocation3 [shape = 's32[1]{0}', space=sflag, size = 0x4, scoped, tag = 'scoped memory for tpu_custom_call.1']
    #allocation4 [shape = 's32[1]{0}', space=sflag, size = 0x4, scoped, tag = 'scoped memory for tpu_custom_call.1']
    #allocation5 [shape = 'u8[8192]{0}', space=vmem, size = 0x2000, scoped, tag = 'input window, operand 1, single buffered']
    #allocation6 [shape = 's32[1]{0}', space=sflag, size = 0x4, scoped, tag = 'scoped memory for tpu_custom_call.1']
    #allocation7 [shape = 'u8[196608]{0}', space=vmem, size = 0x30000, scoped, tag = 'input window, operand 2, single buffered']
    #allocation8 [shape = 'u8[65536]{0}', space=vmem, size = 0x10000, scoped, tag = 'input window, operand 4, single buffered']
    #allocation9 [shape = 's32[1]{0}', space=sflag, size = 0x4, scoped, tag = 'scoped memory for tpu_custom_call.1']
    #allocation10 [shape = 'u8[131072]{0}', space=vmem, size = 0x20000, scoped, tag = 'input window, operand 5, single buffered']
    #allocation11 [shape = 'u8[131072]{0}', space=vmem, size = 0x20000, scoped, tag = 'input window, operand 7, single buffered']
    #allocation12 [shape = 's32[1]{0}', space=sflag, size = 0x4, scoped, tag = 'scoped memory for tpu_custom_call.1']
    #allocation13 [shape = 'u8[8192]{0}', space=vmem, size = 0x2000, scoped, tag = 'output window, operand 0, single buffered']
    %14 = vsyncpa [#allocation3], 0
    %15 = vsyncpa [#allocation6], 0
    %16 = vsyncpa [#allocation9], 0
    %17 = vsyncpa [#allocation12], 0
    %18 = vsyncpa [#allocation4], 0
    // Predicated region
    $region2: #{tpu_custom_call.1} parent=1 // pred_check
      _
    $region3: #{tpu_custom_call.1} parent=1 // pred_check_branch
      %20 = sbr.rel (0) target = $region5
    $region4: #{tpu_custom_call.1} parent=1 // pred_region
      %s22 = ssub.s32 256, 256
      %23 = vsyncadd [#allocation3], %s22
      %s24 = sshll.u32 [#allocation2], 4
      %s25 = int_to_ptr.vmem [resolvable:$true] %s24
      %30 = dma.hbm_to_vmem [thread:$0]  %s0, 256, %s25, [#allocation3], 128, 128, 8
    $region5: #{tpu_custom_call.1} parent=1 // pred_fallthru
      _
    // Predicated region
    $region6: #{tpu_custom_call.1} parent=1 // pred_check
      _
    $region7: #{tpu_custom_call.1} parent=1 // pred_check_branch
      %32 = sbr.rel (0) target = $region9
    $region8: #{tpu_custom_call.1} parent=1 // pred_region
      %s34 = ssub.s32 256, 256
      %35 = vsyncadd [#allocation6], %s34
      %s36 = sshll.u32 [#allocation5], 4
      %s37 = int_to_ptr.vmem [resolvable:$true] %s36
      %42 = dma.hbm_to_vmem [thread:$0]  %s1, 256, %s37, [#allocation6], 128, 128, 8
    $region9: #{tpu_custom_call.1} parent=1 // pred_fallthru
      _
    // Predicated region
    $region10: #{tpu_custom_call.1} parent=1 // pred_check
      _
    $region11: #{tpu_custom_call.1} parent=1 // pred_check_branch
      %44 = sbr.rel (0) target = $region13
    $region12: #{tpu_custom_call.1} parent=1 // pred_region
      %s46 = ssub.s32 6144, 6144
      %47 = vsyncadd [#allocation6], %s46
      %s48 = sshll.u32 [#allocation7], 4
      %s49 = int_to_ptr.vmem [resolvable:$true] %s48
      %54 = dma.hbm_to_vmem [thread:$0]  %s2, 6144, %s49, [#allocation6], 384, 384, 24
    $region13: #{tpu_custom_call.1} parent=1 // pred_fallthru
      _
    // Predicated region
    $region14: #{tpu_custom_call.1} parent=1 // pred_check
      _
    $region15: #{tpu_custom_call.1} parent=1 // pred_check_branch
      %56 = sbr.rel (0) target = $region17
    $region16: #{tpu_custom_call.1} parent=1 // pred_region
      _
    $region17: #{tpu_custom_call.1} parent=1 // pred_fallthru
      _
    // Predicated region
    $region18: #{tpu_custom_call.1} parent=1 // pred_check
      _
    $region19: #{tpu_custom_call.1} parent=1 // pred_check_branch
      %58 = sbr.rel (0) target = $region21
    $region20: #{tpu_custom_call.1} parent=1 // pred_region
      %s60 = ssub.s32 2048, 2048
      %61 = vsyncadd [#allocation9], %s60
      %s62 = sshll.u32 [#allocation8], 4
      %s63 = int_to_ptr.vmem [resolvable:$true] %s62
      %68 = dma.hbm_to_vmem [thread:$0]  %s4, 2048, %s63, [#allocation9], 128, 128, 8
    $region21: #{tpu_custom_call.1} parent=1 // pred_fallthru
      _
    // Predicated region
    $region22: #{tpu_custom_call.1} parent=1 // pred_check
      _
    $region23: #{tpu_custom_call.1} parent=1 // pred_check_branch
      %70 = sbr.rel (0) target = $region25
    $region24: #{tpu_custom_call.1} parent=1 // pred_region
      %s72 = ssub.s32 4096, 4096
      %73 = vsyncadd [#allocation9], %s72
      %s74 = sshll.u32 [#allocation10], 4
      %s75 = int_to_ptr.vmem [resolvable:$true] %s74
      %80 = dma.hbm_to_vmem [thread:$0]  %s5, 4096, %s75, [#allocation9], 256, 256, 16
    $region25: #{tpu_custom_call.1} parent=1 // pred_fallthru
      _
    // Predicated region
    $region26: #{tpu_custom_call.1} parent=1 // pred_check
      _
    $region27: #{tpu_custom_call.1} parent=1 // pred_check_branch
      %82 = sbr.rel (0) target = $region29
    $region28: #{tpu_custom_call.1} parent=1 // pred_region
      _
    $region29: #{tpu_custom_call.1} parent=1 // pred_fallthru
      _
    // Predicated region
    $region30: #{tpu_custom_call.1} parent=1 // pred_check
      _
    $region31: #{tpu_custom_call.1} parent=1 // pred_check_branch
      %84 = sbr.rel (0) target = $region33
    $region32: #{tpu_custom_call.1} parent=1 // pred_region
      %s86 = ssub.s32 4096, 4096
      %87 = vsyncadd [#allocation12], %s86
      %s88 = sshll.u32 [#allocation11], 4
      %s89 = int_to_ptr.vmem [resolvable:$true] %s88
      %94 = dma.hbm_to_vmem [thread:$0]  %s7, 4096, %s89, [#allocation12], 128, 128, 8
    $region33: #{tpu_custom_call.1} parent=1 // pred_fallthru
      _
    // Predicated region
    $region34: #{tpu_custom_call.1} parent=1 // pred_check
      _
    $region35: #{tpu_custom_call.1} parent=1 // pred_check_branch
      %96 = sbr.rel (0) target = $region37
    $region36: #{tpu_custom_call.1} parent=1 // pred_region
      _
    $region37: #{tpu_custom_call.1} parent=1 // pred_fallthru
      _
    // Predicated region
    $region38: #{tpu_custom_call.1} parent=1 // pred_check
      _
    $region39: #{tpu_custom_call.1} parent=1 // pred_check_branch
      %98 = sbr.rel (0) target = $region41
    $region40: #{tpu_custom_call.1} parent=1 // pred_region
      %99 = dma.done [#allocation3], 256
    $region41: #{tpu_custom_call.1} parent=1 // pred_fallthru
      _
    // Predicated region
    $region42: #{tpu_custom_call.1} parent=1 // pred_check
      _
    $region43: #{tpu_custom_call.1} parent=1 // pred_check_branch
      %101 = sbr.rel (0) target = $region45
    $region44: #{tpu_custom_call.1} parent=1 // pred_region
      %102 = dma.done [#allocation6], 256
    $region45: #{tpu_custom_call.1} parent=1 // pred_fallthru
      _
    // Predicated region
    $region46: #{tpu_custom_call.1} parent=1 // pred_check
      _
    $region47: #{tpu_custom_call.1} parent=1 // pred_check_branch
      %104 = sbr.rel (0) target = $region49
    $region48: #{tpu_custom_call.1} parent=1 // pred_region
      %105 = dma.done [#allocation6], 6144
    $region49: #{tpu_custom_call.1} parent=1 // pred_fallthru
      _
    // Predicated region
    $region50: #{tpu_custom_call.1} parent=1 // pred_check
      _
    $region51: #{tpu_custom_call.1} parent=1 // pred_check_branch
      %107 = sbr.rel (0) target = $region53
    $region52: #{tpu_custom_call.1} parent=1 // pred_region
      %108 = dma.done [#allocation9], 2048
    $region53: #{tpu_custom_call.1} parent=1 // pred_fallthru
      _
    // Predicated region
    $region54: #{tpu_custom_call.1} parent=1 // pred_check
      _
    $region55: #{tpu_custom_call.1} parent=1 // pred_check_branch
      %110 = sbr.rel (0) target = $region57
    $region56: #{tpu_custom_call.1} parent=1 // pred_region
      %111 = dma.done [#allocation9], 4096
    $region57: #{tpu_custom_call.1} parent=1 // pred_fallthru
      _
    // Predicated region
    $region58: #{tpu_custom_call.1} parent=1 // pred_check
      _
    $region59: #{tpu_custom_call.1} parent=1 // pred_check_branch
      %113 = sbr.rel (0) target = $region61
    $region60: #{tpu_custom_call.1} parent=1 // pred_region
      %114 = dma.done [#allocation12], 4096
    $region61: #{tpu_custom_call.1} parent=1 // pred_fallthru
      _
    %v115 = vld [vmem:[#allocation2] sm:$0xff]
    %v116 = vld [vmem:[#allocation2 + $0x8] sm:$0xff]
    %v117 = vld [vmem:[#allocation5] sm:$0xff]
    %v118 = vld [vmem:[#allocation5 + $0x8] sm:$0xff]
    %v119 = vld [vmem:[%s8] sm:$0x1]
    %v120 = vld [vmem:[%s8 + $0x1] sm:$0x1]
    %v121 = vld [vmem:[%s8 + $0x2] sm:$0x1]
    %v122 = vld [vmem:[%s8 + $0x3] sm:$0x1]
    %v123 = vld [vmem:[%s8 + $0x4] sm:$0x1]
    %v124 = vld [vmem:[%s8 + $0x5] sm:$0x1]
    %v125 = vld [vmem:[%s8 + $0x6] sm:$0x1]
    %v126 = vld [vmem:[%s8 + $0x7] sm:$0x1]
    %v127 = vld [vmem:[#allocation7] sm:$0xff]
    %v128 = vld [vmem:[#allocation7 + $0x8] sm:$0xff]
    %v129 = vld [vmem:[#allocation7 + $0x10] sm:$0xff]
    %v130 = vld [vmem:[#allocation7 + $0x18] sm:$0xff]
    %v131 = vld [vmem:[#allocation7 + $0x20] sm:$0xff]
    %v132 = vld [vmem:[#allocation7 + $0x28] sm:$0xff]
    %v133 = vld [vmem:[#allocation7 + $0x30] sm:$0xff]
    %v134 = vld [vmem:[#allocation7 + $0x38] sm:$0xff]
    %v135 = vld [vmem:[#allocation7 + $0x40] sm:$0xff]
    %v136 = vld [vmem:[#allocation7 + $0x48] sm:$0xff]
    %v137 = vld [vmem:[#allocation7 + $0x50] sm:$0xff]
    %v138 = vld [vmem:[#allocation7 + $0x58] sm:$0xff]
    %v139 = vld [vmem:[#allocation7 + $0x60] sm:$0xff]
    %v140 = vld [vmem:[#allocation7 + $0x68] sm:$0xff]
    %v141 = vld [vmem:[#allocation7 + $0x70] sm:$0xff]
    %v142 = vld [vmem:[#allocation7 + $0x78] sm:$0xff]
    %v143 = vld [vmem:[#allocation7 + $0x80] sm:$0xff]
    %v144 = vld [vmem:[#allocation7 + $0x88] sm:$0xff]
    %v145 = vld [vmem:[#allocation7 + $0x90] sm:$0xff]
    %v146 = vld [vmem:[#allocation7 + $0x98] sm:$0xff]
    %v147 = vld [vmem:[#allocation7 + $0xa0] sm:$0xff]
    %v148 = vld [vmem:[#allocation7 + $0xa8] sm:$0xff]
    %v149 = vld [vmem:[#allocation7 + $0xb0] sm:$0xff]
    %v150 = vld [vmem:[#allocation7 + $0xb8] sm:$0xff]
    %v151 = vld [vmem:[#allocation7 + $0xc0] sm:$0xff]
    %v152 = vld [vmem:[#allocation7 + $0xc8] sm:$0xff]
    %v153 = vld [vmem:[#allocation7 + $0xd0] sm:$0xff]
    %v154 = vld [vmem:[#allocation7 + $0xd8] sm:$0xff]
    %v155 = vld [vmem:[#allocation7 + $0xe0] sm:$0xff]
    %v156 = vld [vmem:[#allocation7 + $0xe8] sm:$0xff]
    %v157 = vld [vmem:[#allocation7 + $0xf0] sm:$0xff]
    %v158 = vld [vmem:[#allocation7 + $0xf8] sm:$0xff]
    %v159 = vld [vmem:[#allocation7 + $0x100] sm:$0xff]
    %v160 = vld [vmem:[#allocation7 + $0x108] sm:$0xff]
    %v161 = vld [vmem:[#allocation7 + $0x110] sm:$0xff]
    %v162 = vld [vmem:[#allocation7 + $0x118] sm:$0xff]
    %v163 = vld [vmem:[#allocation7 + $0x120] sm:$0xff]
    %v164 = vld [vmem:[#allocation7 + $0x128] sm:$0xff]
    %v165 = vld [vmem:[#allocation7 + $0x130] sm:$0xff]
    %v166 = vld [vmem:[#allocation7 + $0x138] sm:$0xff]
    %v167 = vld [vmem:[#allocation7 + $0x140] sm:$0xff]
    %v168 = vld [vmem:[#allocation7 + $0x148] sm:$0xff]
    %v169 = vld [vmem:[#allocation7 + $0x150] sm:$0xff]
    %v170 = vld [vmem:[#allocation7 + $0x158] sm:$0xff]
    %v171 = vld [vmem:[#allocation7 + $0x160] sm:$0xff]
    %v172 = vld [vmem:[#allocation7 + $0x168] sm:$0xff]
    %v173 = vld [vmem:[#allocation7 + $0x170] sm:$0xff]
    %v174 = vld [vmem:[#allocation7 + $0x178] sm:$0xff]
    %v175 = vld [vmem:[%s3] sm:$0x7]
    %v177 = vlaneseq
    %v178 = vshrl.u32 %v177, 7
    %v179 = vsub.s32 0, %v178
    %v180 = vrot.slane %v175, %v179
    %v181 = vlaneseq
    %v182 = vshrl.u32 %v181, 7
    %v183 = vsub.s32 1, %v182
    %v184 = vrot.slane %v175, %v183
    %v185 = vlaneseq
    %v186 = vshrl.u32 %v185, 7
    %v187 = vsub.s32 2, %v186
    %v188 = vrot.slane %v175, %v187
    %192 = vmatprep.subr.mxu0 %v128
    %193 = vmatpush1.msra.mxu0 %v127
    %194 = vmatprep.subr.mxu0 %v131
    %195 = vmatpush1.msra.mxu0 %v130
    %196 = vmatprep.subr.mxu0 %v134
    %197 = vmatpush1.msra.mxu0 %v133
    %198 = vmatprep.subr.mxu0 %v137
    %199 = vmatpush1.msra.mxu0 %v136
    %200 = vmatprep.subr.mxu0 %v140
    %201 = vmatpush1.msra.mxu0 %v139
    %202 = vmatprep.subr.mxu0 %v143
    %203 = vmatpush1.msra.mxu0 %v142
    %204 = vmatprep.subr.mxu0 %v146
    %205 = vmatpush1.msra.mxu0 %v145
    %206 = vmatprep.subr.mxu0 %v149
    %207 = vmatpush1.msra.mxu0 %v148
    %208 = vmatprep.subr.mxu0 %v152
    %209 = vmatpush1.msra.mxu0 %v151
    %210 = vmatprep.subr.mxu0 %v155
    %211 = vmatpush1.msra.mxu0 %v154
    %212 = vmatprep.subr.mxu0 %v158
    %213 = vmatpush1.msra.mxu0 %v157
    %214 = vmatprep.subr.mxu0 %v161
    %215 = vmatpush1.msra.mxu0 %v160
    %216 = vmatprep.subr.mxu0 %v164
    %217 = vmatpush1.msra.mxu0 %v163
    %218 = vmatprep.subr.mxu0 %v167
    %219 = vmatpush1.msra.mxu0 %v166
    %220 = vmatprep.subr.mxu0 %v170
    %221 = vmatpush1.msra.mxu0 %v169
    %222 = vmatprep.subr.mxu0 %v173
    %223 = vmatpush1.msra.mxu0 %v172
    %224 = vmatprep.subr.mxu0 0.0
    %225 = vmatpush1.msra.mxu0 0.0
    %226 = vmatprep.subr.mxu0 0.0
    %227 = vmatpush1.msra.mxu0 0.0
    %228 = vmatprep.subr.mxu0 0.0
    %229 = vmatpush1.msra.mxu0 0.0
    %230 = vmatprep.subr.mxu0 0.0
    %231 = vmatpush1.msra.mxu0 0.0
    %232 = vmatprep.subr.mxu0 0.0
    %233 = vmatpush1.msra.mxu0 0.0
    %234 = vmatprep.subr.mxu0 0.0
    %235 = vmatpush1.msra.mxu0 0.0
    %236 = vmatprep.subr.mxu0 0.0
    %237 = vmatpush1.msra.mxu0 0.0
    %238 = vmatprep.subr.mxu0 0.0
    %239 = vmatpush1.msra.mxu0 0.0
    %240 = vmatprep.subr.mxu0 0.0
    %241 = vmatpush1.msra.mxu0 0.0
    %242 = vmatprep.subr.mxu0 0.0
    %243 = vmatpush1.msra.mxu0 0.0
    %244 = vmatprep.subr.mxu0 0.0
    %245 = vmatpush1.msra.mxu0 0.0
    %246 = vmatprep.subr.mxu0 0.0
    %247 = vmatpush1.msra.mxu0 0.0
    %248 = vmatprep.subr.mxu0 0.0
    %249 = vmatpush1.msra.mxu0 0.0
    %250 = vmatprep.subr.mxu0 0.0
    %251 = vmatpush1.msra.mxu0 0.0
    %252 = vmatprep.subr.mxu0 0.0
    %253 = vmatpush1.msra.mxu0 0.0
    %254 = vmatprep.subr.mxu0 0.0
    %255 = vmatpush1.msra.mxu0 0.0
    %256 = vmatprep.mubr.f32.mxu0 0.0
    %257 = vmatmul.mubr.f32.gmra.mrb[0].mxu0 %v115
    %v258 = vpop.f32.mrb[0].mxu0
    %v259 = vadd.f32 %v180, %v258
    %v260 = vpop.f32.mrb[0].mxu0
    %v261 = vadd.f32 %v184, %v260
    %262 = vmatprep.mubr.f32.mxu0 0.0
    %263 = vmatmul.mubr.f32.gmra.mrb[0].mxu0 %v116
    %v264 = vpop.f32.mrb[0].mxu0
    %v265 = vadd.f32 %v180, %v264
    %v266 = vpop.f32.mrb[0].mxu0
    %v267 = vadd.f32 %v184, %v266
    %268 = vdwg.mxu0
    %269 = vmatprep.subr.mxu0 0.0
    %270 = vmatpush1.msra.mxu0 %v129
    %271 = vmatprep.subr.mxu0 0.0
    %272 = vmatpush1.msra.mxu0 %v132
    %273 = vmatprep.subr.mxu0 0.0
    %274 = vmatpush1.msra.mxu0 %v135
    %275 = vmatprep.subr.mxu0 0.0
    %276 = vmatpush1.msra.mxu0 %v138
    %277 = vmatprep.subr.mxu0 0.0
    %278 = vmatpush1.msra.mxu0 %v141
    %279 = vmatprep.subr.mxu0 0.0
    %280 = vmatpush1.msra.mxu0 %v144
    %281 = vmatprep.subr.mxu0 0.0
    %282 = vmatpush1.msra.mxu0 %v147
    %283 = vmatprep.subr.mxu0 0.0
    %284 = vmatpush1.msra.mxu0 %v150
    %285 = vmatprep.subr.mxu0 0.0
    %286 = vmatpush1.msra.mxu0 %v153
    %287 = vmatprep.subr.mxu0 0.0
    %288 = vmatpush1.msra.mxu0 %v156
    %289 = vmatprep.subr.mxu0 0.0
    %290 = vmatpush1.msra.mxu0 %v159
    %291 = vmatprep.subr.mxu0 0.0
    %292 = vmatpush1.msra.mxu0 %v162
    %293 = vmatprep.subr.mxu0 0.0
    %294 = vmatpush1.msra.mxu0 %v165
    %295 = vmatprep.subr.mxu0 0.0
    %296 = vmatpush1.msra.mxu0 %v168
    %297 = vmatprep.subr.mxu0 0.0
    %298 = vmatpush1.msra.mxu0 %v171
    %299 = vmatprep.subr.mxu0 0.0
    %300 = vmatpush1.msra.mxu0 %v174
    %301 = vmatprep.subr.mxu0 0.0
    %302 = vmatpush1.msra.mxu0 0.0
    %303 = vmatprep.subr.mxu0 0.0
    %304 = vmatpush1.msra.mxu0 0.0
    %305 = vmatprep.subr.mxu0 0.0
    %306 = vmatpush1.msra.mxu0 0.0
    %307 = vmatprep.subr.mxu0 0.0
    %308 = vmatpush1.msra.mxu0 0.0
    %309 = vmatprep.subr.mxu0 0.0
    %310 = vmatpush1.msra.mxu0 0.0
    %311 = vmatprep.subr.mxu0 0.0
    %312 = vmatpush1.msra.mxu0 0.0
    %313 = vmatprep.subr.mxu0 0.0
    %314 = vmatpush1.msra.mxu0 0.0
    %315 = vmatprep.subr.mxu0 0.0
    %316 = vmatpush1.msra.mxu0 0.0
    %317 = vmatprep.subr.mxu0 0.0
    %318 = vmatpush1.msra.mxu0 0.0
    %319 = vmatprep.subr.mxu0 0.0
    %320 = vmatpush1.msra.mxu0 0.0
    %321 = vmatprep.subr.mxu0 0.0
    %322 = vmatpush1.msra.mxu0 0.0
    %323 = vmatprep.subr.mxu0 0.0
    %324 = vmatpush1.msra.mxu0 0.0
    %325 = vmatprep.subr.mxu0 0.0
    %326 = vmatpush1.msra.mxu0 0.0
    %327 = vmatprep.subr.mxu0 0.0
    %328 = vmatpush1.msra.mxu0 0.0
    %329 = vmatprep.subr.mxu0 0.0
    %330 = vmatpush1.msra.mxu0 0.0
    %331 = vmatprep.subr.mxu0 0.0
    %332 = vmatpush1.msra.mxu0 0.0
    %333 = vmatprep.mubr.f32.mxu0 0.0
    %334 = vmatmul.mubr.f32.gmra.mrb[0].mxu0 %v115
    %v335 = vpop.f32.mrb[0].mxu0
    %v336 = vadd.f32 %v188, %v335
    %v337 = vpop.f32.mrb[0].mxu0
    %338 = vmatprep.mubr.f32.mxu0 0.0
    %339 = vmatmul.mubr.f32.gmra.mrb[0].mxu0 %v116
    %v340 = vpop.f32.mrb[0].mxu0
    %v341 = vadd.f32 %v188, %v340
    %v342 = vpop.f32.mrb[0].mxu0
    %343 = vdwg.mxu0
    %v344 = vlaneseq
    %v345 = vshrl.u32 %v344, 7
    %v346 = vsub.s32 0, %v345
    %v347 = vrot.slane %v119, %v346
    %vm348 = vcmask 261120
    %v350 = vsel %vm348, %v259, 0
    %v353 = vsel %vm348, %v265, 0
    %v356 = vsel %vm348, %v261, 0
    %v359 = vsel %vm348, %v267, 0
    %361 = vmatprep.subr.mxu0 0.0
    %362 = vmatpush1.xpose.msra.mxu0 %v356
    %363 = vmatprep.subr.mxu0 0.0
    %364 = vmatpush1.xpose.msra.mxu0 %v359
    %365 = vmatprep.subr.mxu0 0.0
    %366 = vmatpush1.xpose.msra.mxu0 0.0
    %367 = vmatprep.subr.mxu0 0.0
    %368 = vmatpush1.xpose.msra.mxu0 0.0
    %369 = vmatprep.subr.mxu0 0.0
    %370 = vmatpush1.xpose.msra.mxu0 0.0
    %371 = vmatprep.subr.mxu0 0.0
    %372 = vmatpush1.xpose.msra.mxu0 0.0
    %373 = vmatprep.subr.mxu0 0.0
    %374 = vmatpush1.xpose.msra.mxu0 0.0
    %375 = vmatprep.subr.mxu0 0.0
    %376 = vmatpush1.xpose.msra.mxu0 0.0
    %377 = vmatprep.subr.mxu0 0.0
    %378 = vmatpush1.xpose.msra.mxu0 0.0
    %379 = vmatprep.subr.mxu0 0.0
    %380 = vmatpush1.xpose.msra.mxu0 0.0
    %381 = vmatprep.subr.mxu0 0.0
    %382 = vmatpush1.xpose.msra.mxu0 0.0
    %383 = vmatprep.subr.mxu0 0.0
    %384 = vmatpush1.xpose.msra.mxu0 0.0
    %385 = vmatprep.subr.mxu0 0.0
    %386 = vmatpush1.xpose.msra.mxu0 0.0
    %387 = vmatprep.subr.mxu0 0.0
    %388 = vmatpush1.xpose.msra.mxu0 0.0
    %389 = vmatprep.subr.mxu0 0.0
    %390 = vmatpush1.xpose.msra.mxu0 0.0
    %391 = vmatprep.subr.mxu0 0.0
    %392 = vmatpush1.xpose.msra.mxu0 0.0
    %393 = vmatprep.subr.mxu0 0.0
    %394 = vmatpush1.xpose.msra.mxu0 0.0
    %395 = vmatprep.subr.mxu0 0.0
    %396 = vmatpush1.xpose.msra.mxu0 0.0
    %397 = vmatprep.subr.mxu0 0.0
    %398 = vmatpush1.xpose.msra.mxu0 0.0
    %399 = vmatprep.subr.mxu0 0.0
    %400 = vmatpush1.xpose.msra.mxu0 0.0
    %401 = vmatprep.subr.mxu0 0.0
    %402 = vmatpush1.xpose.msra.mxu0 0.0
    %403 = vmatprep.subr.mxu0 0.0
    %404 = vmatpush1.xpose.msra.mxu0 0.0
    %405 = vmatprep.subr.mxu0 0.0
    %406 = vmatpush1.xpose.msra.mxu0 0.0
    %407 = vmatprep.subr.mxu0 0.0
    %408 = vmatpush1.xpose.msra.mxu0 0.0
    %409 = vmatprep.subr.mxu0 0.0
    %410 = vmatpush1.xpose.msra.mxu0 0.0
    %411 = vmatprep.subr.mxu0 0.0
    %412 = vmatpush1.xpose.msra.mxu0 0.0
    %413 = vmatprep.subr.mxu0 0.0
    %414 = vmatpush1.xpose.msra.mxu0 0.0
    %415 = vmatprep.subr.mxu0 0.0
    %416 = vmatpush1.xpose.msra.mxu0 0.0
    %417 = vmatprep.subr.mxu0 0.0
    %418 = vmatpush1.xpose.msra.mxu0 0.0
    %419 = vmatprep.subr.mxu0 0.0
    %420 = vmatpush1.xpose.msra.mxu0 0.0
    %421 = vmatprep.subr.mxu0 0.0
    %422 = vmatpush1.xpose.msra.mxu0 0.0
    %423 = vmatprep.subr.mxu0 0.0
    %424 = vmatpush1.xpose.msra.mxu0 0.0
    %425 = vmatprep.mubr.f32.mxu0 0.0
    %426 = vmatmul.mubr.f32.gmra.mrb[0].mxu0 %v350
    %v427 = vpop.f32.mrb[0].mxu0
    %v428 = vadd.f32 0.0, %v427
    %v429 = vpop.f32.mrb[0].mxu0
    %430 = vmatprep.mubr.f32.mxu0 0.0
    %431 = vmatmul.mubr.f32.gmra.mrb[0].mxu0 %v353
    %v432 = vpop.f32.mrb[0].mxu0
    %v433 = vadd.f32 0.0, %v432
    %v434 = vpop.f32.mrb[0].mxu0
    %435 = vdwg.mxu0
    %v436 = vmul.f32 %v428, 0.17677669
    %v437 = vmul.f32 %v433, 0.17677669
    %v438 = vadd.f32 %v436, %v117
    %v439 = vadd.f32 %v437, %v118
    %vm440 = vcmask 130048
    %v441 = vsel %vm440, %v438, -inf
    %442 = vmax.xlane.f32.xlu0 %v441
    %v443 = vpop.xlane.xlu0 %442
    %v444 = vsel %vm440, %v439, -inf
    %445 = vmax.xlane.f32.xlu0 %v444
    %v446 = vpop.xlane.xlu0 %445
    %v447 = vsub.f32 %v438, %v443
    %v448 = vsub.f32 %v439, %v446
    %v449 = vmul.f32 %v447, 1.442695
    %v450 = vpow.pop %v449
    %v451 = vmul.f32 %v448, 1.442695
    %v452 = vpow.pop %v451
    %v453 = vsel %vm440, %v450, 0.0
    %454 = vadd.xlane.f32.xlu0 %v453
    %v455 = vpop.xlane.xlu0 %454
    %v456 = vsel %vm440, %v452, 0.0
    %457 = vadd.xlane.f32.xlu0 %v456
    %v458 = vpop.xlane.xlu0 %457
    %v459 = vrcp.pop %v455
    %v460 = vrcp.pop %v458
    %v461 = vmul.f32 %v450, %v459
    %v462 = vmul.f32 %v452, %v460
    %v464 = vsel %vm440, %v461, 0
    %v467 = vsel %vm440, %v462, 0
    %469 = vmatprep.subr.mxu0 0.0
    %470 = vmatpush1.msra.mxu0 %v336
    %471 = vmatprep.subr.mxu0 0.0
    %472 = vmatpush1.msra.mxu0 %v341
    %473 = vmatprep.subr.mxu0 0.0
    %474 = vmatpush1.msra.mxu0 0.0
    %475 = vmatprep.subr.mxu0 0.0
    %476 = vmatpush1.msra.mxu0 0.0
    %477 = vmatprep.subr.mxu0 0.0
    %478 = vmatpush1.msra.mxu0 0.0
    %479 = vmatprep.subr.mxu0 0.0
    %480 = vmatpush1.msra.mxu0 0.0
    %481 = vmatprep.subr.mxu0 0.0
    %482 = vmatpush1.msra.mxu0 0.0
    %483 = vmatprep.subr.mxu0 0.0
    %484 = vmatpush1.msra.mxu0 0.0
    %485 = vmatprep.subr.mxu0 0.0
    %486 = vmatpush1.msra.mxu0 0.0
    %487 = vmatprep.subr.mxu0 0.0
    %488 = vmatpush1.msra.mxu0 0.0
    %489 = vmatprep.subr.mxu0 0.0
    %490 = vmatpush1.msra.mxu0 0.0
    %491 = vmatprep.subr.mxu0 0.0
    %492 = vmatpush1.msra.mxu0 0.0
    %493 = vmatprep.subr.mxu0 0.0
    %494 = vmatpush1.msra.mxu0 0.0
    %495 = vmatprep.subr.mxu0 0.0
    %496 = vmatpush1.msra.mxu0 0.0
    %497 = vmatprep.subr.mxu0 0.0
    %498 = vmatpush1.msra.mxu0 0.0
    %499 = vmatprep.subr.mxu0 0.0
    %500 = vmatpush1.msra.mxu0 0.0
    %501 = vmatprep.subr.mxu0 0.0
    %502 = vmatpush1.msra.mxu0 0.0
    %503 = vmatprep.subr.mxu0 0.0
    %504 = vmatpush1.msra.mxu0 0.0
    %505 = vmatprep.subr.mxu0 0.0
    %506 = vmatpush1.msra.mxu0 0.0
    %507 = vmatprep.subr.mxu0 0.0
    %508 = vmatpush1.msra.mxu0 0.0
    %509 = vmatprep.subr.mxu0 0.0
    %510 = vmatpush1.msra.mxu0 0.0
    %511 = vmatprep.subr.mxu0 0.0
    %512 = vmatpush1.msra.mxu0 0.0
    %513 = vmatprep.subr.mxu0 0.0
    %514 = vmatpush1.msra.mxu0 0.0
    %515 = vmatprep.subr.mxu0 0.0
    %516 = vmatpush1.msra.mxu0 0.0
    %517 = vmatprep.subr.mxu0 0.0
    %518 = vmatpush1.msra.mxu0 0.0
    %519 = vmatprep.subr.mxu0 0.0
    %520 = vmatpush1.msra.mxu0 0.0
    %521 = vmatprep.subr.mxu0 0.0
    %522 = vmatpush1.msra.mxu0 0.0
    %523 = vmatprep.subr.mxu0 0.0
    %524 = vmatpush1.msra.mxu0 0.0
    %525 = vmatprep.subr.mxu0 0.0
    %526 = vmatpush1.msra.mxu0 0.0
    %527 = vmatprep.subr.mxu0 0.0
    %528 = vmatpush1.msra.mxu0 0.0
    %529 = vmatprep.subr.mxu0 0.0
    %530 = vmatpush1.msra.mxu0 0.0
    %531 = vmatprep.subr.mxu0 0.0
    %532 = vmatpush1.msra.mxu0 0.0
    %533 = vmatprep.mubr.f32.mxu0 0.0
    %534 = vmatmul.mubr.f32.gmra.mrb[0].mxu0 %v464
    %v535 = vpop.f32.mrb[0].mxu0
    %v536 = vadd.f32 0.0, %v535
    %v537 = vpop.f32.mrb[0].mxu0
    %538 = vmatprep.mubr.f32.mxu0 0.0
    %539 = vmatmul.mubr.f32.gmra.mrb[0].mxu0 %v467
    %v540 = vpop.f32.mrb[0].mxu0
    %v541 = vadd.f32 0.0, %v540
    %v542 = vpop.f32.mrb[0].mxu0
    %543 = vdwg.mxu0
    %v544 = vld [vmem:[#allocation8] sm:$0xff]
    %v545 = vld [vmem:[#allocation8 + $0x8] sm:$0xff]
    %v546 = vld [vmem:[#allocation8 + $0x10] sm:$0xff]
    %v547 = vld [vmem:[#allocation8 + $0x18] sm:$0xff]
    %v549 = vsel %vm348, %v536, 0
    %v552 = vsel %vm348, %v541, 0
    %554 = vmatprep.subr.mxu0 0.0
    %555 = vmatpush1.msra.mxu0 %v544
    %556 = vmatprep.subr.mxu0 0.0
    %557 = vmatpush1.msra.mxu0 %v545
    %558 = vmatprep.subr.mxu0 0.0
    %559 = vmatpush1.msra.mxu0 %v546
    %560 = vmatprep.subr.mxu0 0.0
    %561 = vmatpush1.msra.mxu0 %v547
    %562 = vmatprep.subr.mxu0 0.0
    %563 = vmatpush1.msra.mxu0 0.0
    %564 = vmatprep.subr.mxu0 0.0
    %565 = vmatpush1.msra.mxu0 0.0
    %566 = vmatprep.subr.mxu0 0.0
    %567 = vmatpush1.msra.mxu0 0.0
    %568 = vmatprep.subr.mxu0 0.0
    %569 = vmatpush1.msra.mxu0 0.0
    %570 = vmatprep.subr.mxu0 0.0
    %571 = vmatpush1.msra.mxu0 0.0
    %572 = vmatprep.subr.mxu0 0.0
    %573 = vmatpush1.msra.mxu0 0.0
    %574 = vmatprep.subr.mxu0 0.0
    %575 = vmatpush1.msra.mxu0 0.0
    %576 = vmatprep.subr.mxu0 0.0
    %577 = vmatpush1.msra.mxu0 0.0
    %578 = vmatprep.subr.mxu0 0.0
    %579 = vmatpush1.msra.mxu0 0.0
    %580 = vmatprep.subr.mxu0 0.0
    %581 = vmatpush1.msra.mxu0 0.0
    %582 = vmatprep.subr.mxu0 0.0
    %583 = vmatpush1.msra.mxu0 0.0
    %584 = vmatprep.subr.mxu0 0.0
    %585 = vmatpush1.msra.mxu0 0.0
    %586 = vmatprep.subr.mxu0 0.0
    %587 = vmatpush1.msra.mxu0 0.0
    %588 = vmatprep.subr.mxu0 0.0
    %589 = vmatpush1.msra.mxu0 0.0
    %590 = vmatprep.subr.mxu0 0.0
    %591 = vmatpush1.msra.mxu0 0.0
    %592 = vmatprep.subr.mxu0 0.0
    %593 = vmatpush1.msra.mxu0 0.0
    %594 = vmatprep.subr.mxu0 0.0
    %595 = vmatpush1.msra.mxu0 0.0
    %596 = vmatprep.subr.mxu0 0.0
    %597 = vmatpush1.msra.mxu0 0.0
    %598 = vmatprep.subr.mxu0 0.0
    %599 = vmatpush1.msra.mxu0 0.0
    %600 = vmatprep.subr.mxu0 0.0
    %601 = vmatpush1.msra.mxu0 0.0
    %602 = vmatprep.subr.mxu0 0.0
    %603 = vmatpush1.msra.mxu0 0.0
    %604 = vmatprep.subr.mxu0 0.0
    %605 = vmatpush1.msra.mxu0 0.0
    %606 = vmatprep.subr.mxu0 0.0
    %607 = vmatpush1.msra.mxu0 0.0
    %608 = vmatprep.subr.mxu0 0.0
    %609 = vmatpush1.msra.mxu0 0.0
    %610 = vmatprep.subr.mxu0 0.0
    %611 = vmatpush1.msra.mxu0 0.0
    %612 = vmatprep.subr.mxu0 0.0
    %613 = vmatpush1.msra.mxu0 0.0
    %614 = vmatprep.subr.mxu0 0.0
    %615 = vmatpush1.msra.mxu0 0.0
    %616 = vmatprep.subr.mxu0 0.0
    %617 = vmatpush1.msra.mxu0 0.0
    %618 = vmatprep.mubr.f32.mxu0 0.0
    %619 = vmatmul.mubr.f32.gmra.mrb[0].mxu0 %v549
    %v620 = vpop.f32.mrb[0].mxu0
    %v621 = vadd.f32 0.0, %v620
    %v622 = vpop.f32.mrb[0].mxu0
    %623 = vmatprep.mubr.f32.mxu0 0.0
    %624 = vmatmul.mubr.f32.gmra.mrb[0].mxu0 %v552
    %v625 = vpop.f32.mrb[0].mxu0
    %v626 = vadd.f32 0.0, %v625
    %v627 = vpop.f32.mrb[0].mxu0
    %628 = vdwg.mxu0
    %v629 = vadd.f32 %v347, %v621
    %v630 = vadd.f32 %v347, %v626
    %631 = vrot.lane.b32.xlu0 %v259, 96
    %v632 = vpop.permute.xlu0 %631
    %633 = vrot.lane.b32.xlu0 %v265, 96
    %v634 = vpop.permute.xlu0 %633
    %635 = vrot.lane.b32.xlu0 %v261, 96
    %v636 = vpop.permute.xlu0 %635
    %637 = vrot.lane.b32.xlu0 %v267, 96
    %v638 = vpop.permute.xlu0 %637
    %v639 = vsel %vm348, %v632, 0
    %v641 = vsel %vm348, %v634, 0
    %v643 = vsel %vm348, %v636, 0
    %v645 = vsel %vm348, %v638, 0
    %647 = vmatprep.subr.mxu0 0.0
    %648 = vmatpush1.xpose.msra.mxu0 %v643
    %649 = vmatprep.subr.mxu0 0.0
    %650 = vmatpush1.xpose.msra.mxu0 %v645
    %651 = vmatprep.subr.mxu0 0.0
    %652 = vmatpush1.xpose.msra.mxu0 0.0
    %653 = vmatprep.subr.mxu0 0.0
    %654 = vmatpush1.xpose.msra.mxu0 0.0
    %655 = vmatprep.subr.mxu0 0.0
    %656 = vmatpush1.xpose.msra.mxu0 0.0
    %657 = vmatprep.subr.mxu0 0.0
    %658 = vmatpush1.xpose.msra.mxu0 0.0
    %659 = vmatprep.subr.mxu0 0.0
    %660 = vmatpush1.xpose.msra.mxu0 0.0
    %661 = vmatprep.subr.mxu0 0.0
    %662 = vmatpush1.xpose.msra.mxu0 0.0
    %663 = vmatprep.subr.mxu0 0.0
    %664 = vmatpush1.xpose.msra.mxu0 0.0
    %665 = vmatprep.subr.mxu0 0.0
    %666 = vmatpush1.xpose.msra.mxu0 0.0
    %667 = vmatprep.subr.mxu0 0.0
    %668 = vmatpush1.xpose.msra.mxu0 0.0
    %669 = vmatprep.subr.mxu0 0.0
    %670 = vmatpush1.xpose.msra.mxu0 0.0
    %671 = vmatprep.subr.mxu0 0.0
    %672 = vmatpush1.xpose.msra.mxu0 0.0
    %673 = vmatprep.subr.mxu0 0.0
    %674 = vmatpush1.xpose.msra.mxu0 0.0
    %675 = vmatprep.subr.mxu0 0.0
    %676 = vmatpush1.xpose.msra.mxu0 0.0
    %677 = vmatprep.subr.mxu0 0.0
    %678 = vmatpush1.xpose.msra.mxu0 0.0
    %679 = vmatprep.subr.mxu0 0.0
    %680 = vmatpush1.xpose.msra.mxu0 0.0
    %681 = vmatprep.subr.mxu0 0.0
    %682 = vmatpush1.xpose.msra.mxu0 0.0
    %683 = vmatprep.subr.mxu0 0.0
    %684 = vmatpush1.xpose.msra.mxu0 0.0
    %685 = vmatprep.subr.mxu0 0.0
    %686 = vmatpush1.xpose.msra.mxu0 0.0
    %687 = vmatprep.subr.mxu0 0.0
    %688 = vmatpush1.xpose.msra.mxu0 0.0
    %689 = vmatprep.subr.mxu0 0.0
    %690 = vmatpush1.xpose.msra.mxu0 0.0
    %691 = vmatprep.subr.mxu0 0.0
    %692 = vmatpush1.xpose.msra.mxu0 0.0
    %693 = vmatprep.subr.mxu0 0.0
    %694 = vmatpush1.xpose.msra.mxu0 0.0
    %695 = vmatprep.subr.mxu0 0.0
    %696 = vmatpush1.xpose.msra.mxu0 0.0
    %697 = vmatprep.subr.mxu0 0.0
    %698 = vmatpush1.xpose.msra.mxu0 0.0
    %699 = vmatprep.subr.mxu0 0.0
    %700 = vmatpush1.xpose.msra.mxu0 0.0
    %701 = vmatprep.subr.mxu0 0.0
    %702 = vmatpush1.xpose.msra.mxu0 0.0
    %703 = vmatprep.subr.mxu0 0.0
    %704 = vmatpush1.xpose.msra.mxu0 0.0
    %705 = vmatprep.subr.mxu0 0.0
    %706 = vmatpush1.xpose.msra.mxu0 0.0
    %707 = vmatprep.subr.mxu0 0.0
    %708 = vmatpush1.xpose.msra.mxu0 0.0
    %709 = vmatprep.subr.mxu0 0.0
    %710 = vmatpush1.xpose.msra.mxu0 0.0
    %711 = vmatprep.mubr.f32.mxu0 0.0
    %712 = vmatmul.mubr.f32.gmra.mrb[0].mxu0 %v639
    %v713 = vpop.f32.mrb[0].mxu0
    %v714 = vadd.f32 0.0, %v713
    %v715 = vpop.f32.mrb[0].mxu0
    %716 = vmatprep.mubr.f32.mxu0 0.0
    %717 = vmatmul.mubr.f32.gmra.mrb[0].mxu0 %v641
    %v718 = vpop.f32.mrb[0].mxu0
    %v719 = vadd.f32 0.0, %v718
    %v720 = vpop.f32.mrb[0].mxu0
    %721 = vdwg.mxu0
    %v722 = vmul.f32 %v714, 0.17677669
    %v723 = vmul.f32 %v719, 0.17677669
    %v724 = vadd.f32 %v722, %v117
    %v725 = vadd.f32 %v723, %v118
    %v726 = vsel %vm440, %v724, -inf
    %727 = vmax.xlane.f32.xlu0 %v726
    %v728 = vpop.xlane.xlu0 %727
    %v729 = vsel %vm440, %v725, -inf
    %730 = vmax.xlane.f32.xlu0 %v729
    %v731 = vpop.xlane.xlu0 %730
    %v732 = vsub.f32 %v724, %v728
    %v733 = vsub.f32 %v725, %v731
    %v734 = vmul.f32 %v732, 1.442695
    %v735 = vpow.pop %v734
    %v736 = vmul.f32 %v733, 1.442695
    %v737 = vpow.pop %v736
    %v738 = vsel %vm440, %v735, 0.0
    %739 = vadd.xlane.f32.xlu0 %v738
    %v740 = vpop.xlane.xlu0 %739
    %v741 = vsel %vm440, %v737, 0.0
    %742 = vadd.xlane.f32.xlu0 %v741
    %v743 = vpop.xlane.xlu0 %742
    %v744 = vrcp.pop %v740
    %v745 = vrcp.pop %v743
    %v746 = vmul.f32 %v735, %v744
    %v747 = vmul.f32 %v737, %v745
    %750 = vrot.lane.b32.xlu0 %v336, 96
    %v751 = vpop.permute.xlu0 %750
    %752 = vrot.lane.b32.xlu0 %v341, 96
    %v753 = vpop.permute.xlu0 %752
    %v757 = vsel %vm440, %v746, 0
    %v760 = vsel %vm440, %v747, 0
    %762 = vmatprep.subr.mxu0 0.0
    %763 = vmatpush1.msra.mxu0 %v751
    %764 = vmatprep.subr.mxu0 0.0
    %765 = vmatpush1.msra.mxu0 %v753
    %766 = vmatprep.subr.mxu0 0.0
    %767 = vmatpush1.msra.mxu0 0.0
    %768 = vmatprep.subr.mxu0 0.0
    %769 = vmatpush1.msra.mxu0 0.0
    %770 = vmatprep.subr.mxu0 0.0
    %771 = vmatpush1.msra.mxu0 0.0
    %772 = vmatprep.subr.mxu0 0.0
    %773 = vmatpush1.msra.mxu0 0.0
    %774 = vmatprep.subr.mxu0 0.0
    %775 = vmatpush1.msra.mxu0 0.0
    %776 = vmatprep.subr.mxu0 0.0
    %777 = vmatpush1.msra.mxu0 0.0
    %778 = vmatprep.subr.mxu0 0.0
    %779 = vmatpush1.msra.mxu0 0.0
    %780 = vmatprep.subr.mxu0 0.0
    %781 = vmatpush1.msra.mxu0 0.0
    %782 = vmatprep.subr.mxu0 0.0
    %783 = vmatpush1.msra.mxu0 0.0
    %784 = vmatprep.subr.mxu0 0.0
    %785 = vmatpush1.msra.mxu0 0.0
    %786 = vmatprep.subr.mxu0 0.0
    %787 = vmatpush1.msra.mxu0 0.0
    %788 = vmatprep.subr.mxu0 0.0
    %789 = vmatpush1.msra.mxu0 0.0
    %790 = vmatprep.subr.mxu0 0.0
    %791 = vmatpush1.msra.mxu0 0.0
    %792 = vmatprep.subr.mxu0 0.0
    %793 = vmatpush1.msra.mxu0 0.0
    %794 = vmatprep.subr.mxu0 0.0
    %795 = vmatpush1.msra.mxu0 0.0
    %796 = vmatprep.subr.mxu0 0.0
    %797 = vmatpush1.msra.mxu0 0.0
    %798 = vmatprep.subr.mxu0 0.0
    %799 = vmatpush1.msra.mxu0 0.0
    %800 = vmatprep.subr.mxu0 0.0
    %801 = vmatpush1.msra.mxu0 0.0
    %802 = vmatprep.subr.mxu0 0.0
    %803 = vmatpush1.msra.mxu0 0.0
    %804 = vmatprep.subr.mxu0 0.0
    %805 = vmatpush1.msra.mxu0 0.0
    %806 = vmatprep.subr.mxu0 0.0
    %807 = vmatpush1.msra.mxu0 0.0
    %808 = vmatprep.subr.mxu0 0.0
    %809 = vmatpush1.msra.mxu0 0.0
    %810 = vmatprep.subr.mxu0 0.0
    %811 = vmatpush1.msra.mxu0 0.0
    %812 = vmatprep.subr.mxu0 0.0
    %813 = vmatpush1.msra.mxu0 0.0
    %814 = vmatprep.subr.mxu0 0.0
    %815 = vmatpush1.msra.mxu0 0.0
    %816 = vmatprep.subr.mxu0 0.0
    %817 = vmatpush1.msra.mxu0 0.0
    %818 = vmatprep.subr.mxu0 0.0
    %819 = vmatpush1.msra.mxu0 0.0
    %820 = vmatprep.subr.mxu0 0.0
    %821 = vmatpush1.msra.mxu0 0.0
    %822 = vmatprep.subr.mxu0 0.0
    %823 = vmatpush1.msra.mxu0 0.0
    %824 = vmatprep.subr.mxu0 0.0
    %825 = vmatpush1.msra.mxu0 0.0
    %826 = vmatprep.mubr.f32.mxu0 0.0
    %827 = vmatmul.mubr.f32.gmra.mrb[0].mxu0 %v757
    %v828 = vpop.f32.mrb[0].mxu0
    %v829 = vadd.f32 0.0, %v828
    %v830 = vpop.f32.mrb[0].mxu0
    %831 = vmatprep.mubr.f32.mxu0 0.0
    %832 = vmatmul.mubr.f32.gmra.mrb[0].mxu0 %v760
    %v833 = vpop.f32.mrb[0].mxu0
    %v834 = vadd.f32 0.0, %v833
    %v835 = vpop.f32.mrb[0].mxu0
    %836 = vdwg.mxu0
    %v837 = vld [vmem:[#allocation8 + $0x20] sm:$0xff]
    %v838 = vld [vmem:[#allocation8 + $0x28] sm:$0xff]
    %v839 = vld [vmem:[#allocation8 + $0x30] sm:$0xff]
    %v840 = vld [vmem:[#allocation8 + $0x38] sm:$0xff]
    %v842 = vsel %vm348, %v829, 0
    %v845 = vsel %vm348, %v834, 0
    %847 = vmatprep.subr.mxu0 0.0
    %848 = vmatpush1.msra.mxu0 %v837
    %849 = vmatprep.subr.mxu0 0.0
    %850 = vmatpush1.msra.mxu0 %v838
    %851 = vmatprep.subr.mxu0 0.0
    %852 = vmatpush1.msra.mxu0 %v839
    %853 = vmatprep.subr.mxu0 0.0
    %854 = vmatpush1.msra.mxu0 %v840
    %855 = vmatprep.subr.mxu0 0.0
    %856 = vmatpush1.msra.mxu0 0.0
    %857 = vmatprep.subr.mxu0 0.0
    %858 = vmatpush1.msra.mxu0 0.0
    %859 = vmatprep.subr.mxu0 0.0
    %860 = vmatpush1.msra.mxu0 0.0
    %861 = vmatprep.subr.mxu0 0.0
    %862 = vmatpush1.msra.mxu0 0.0
    %863 = vmatprep.subr.mxu0 0.0
    %864 = vmatpush1.msra.mxu0 0.0
    %865 = vmatprep.subr.mxu0 0.0
    %866 = vmatpush1.msra.mxu0 0.0
    %867 = vmatprep.subr.mxu0 0.0
    %868 = vmatpush1.msra.mxu0 0.0
    %869 = vmatprep.subr.mxu0 0.0
    %870 = vmatpush1.msra.mxu0 0.0
    %871 = vmatprep.subr.mxu0 0.0
    %872 = vmatpush1.msra.mxu0 0.0
    %873 = vmatprep.subr.mxu0 0.0
    %874 = vmatpush1.msra.mxu0 0.0
    %875 = vmatprep.subr.mxu0 0.0
    %876 = vmatpush1.msra.mxu0 0.0
    %877 = vmatprep.subr.mxu0 0.0
    %878 = vmatpush1.msra.mxu0 0.0
    %879 = vmatprep.subr.mxu0 0.0
    %880 = vmatpush1.msra.mxu0 0.0
    %881 = vmatprep.subr.mxu0 0.0
    %882 = vmatpush1.msra.mxu0 0.0
    %883 = vmatprep.subr.mxu0 0.0
    %884 = vmatpush1.msra.mxu0 0.0
    %885 = vmatprep.subr.mxu0 0.0
    %886 = vmatpush1.msra.mxu0 0.0
    %887 = vmatprep.subr.mxu0 0.0
    %888 = vmatpush1.msra.mxu0 0.0
    %889 = vmatprep.subr.mxu0 0.0
    %890 = vmatpush1.msra.mxu0 0.0
    %891 = vmatprep.subr.mxu0 0.0
    %892 = vmatpush1.msra.mxu0 0.0
    %893 = vmatprep.subr.mxu0 0.0
    %894 = vmatpush1.msra.mxu0 0.0
    %895 = vmatprep.subr.mxu0 0.0
    %896 = vmatpush1.msra.mxu0 0.0
    %897 = vmatprep.subr.mxu0 0.0
    %898 = vmatpush1.msra.mxu0 0.0
    %899 = vmatprep.subr.mxu0 0.0
    %900 = vmatpush1.msra.mxu0 0.0
    %901 = vmatprep.subr.mxu0 0.0
    %902 = vmatpush1.msra.mxu0 0.0
    %903 = vmatprep.subr.mxu0 0.0
    %904 = vmatpush1.msra.mxu0 0.0
    %905 = vmatprep.subr.mxu0 0.0
    %906 = vmatpush1.msra.mxu0 0.0
    %907 = vmatprep.subr.mxu0 0.0
    %908 = vmatpush1.msra.mxu0 0.0
    %909 = vmatprep.subr.mxu0 0.0
    %910 = vmatpush1.msra.mxu0 0.0
    %911 = vmatprep.mubr.f32.mxu0 0.0
    %912 = vmatmul.mubr.f32.gmra.mrb[0].mxu0 %v842
    %v913 = vpop.f32.mrb[0].mxu0
    %v914 = vadd.f32 0.0, %v913
    %v915 = vpop.f32.mrb[0].mxu0
    %916 = vmatprep.mubr.f32.mxu0 0.0
    %917 = vmatmul.mubr.f32.gmra.mrb[0].mxu0 %v845
    %v918 = vpop.f32.mrb[0].mxu0
    %v919 = vadd.f32 0.0, %v918
    %v920 = vpop.f32.mrb[0].mxu0
    %921 = vdwg.mxu0
    %v922 = vadd.f32 %v629, %v914
    %v923 = vadd.f32 %v630, %v919
    %924 = vrot.lane.b32.xlu0 %v259, 64
    %v925 = vpop.permute.xlu0 %924
    %926 = vrot.lane.b32.xlu0 %v265, 64
    %v927 = vpop.permute.xlu0 %926
    %928 = vrot.lane.b32.xlu0 %v261, 64
    %v929 = vpop.permute.xlu0 %928
    %930 = vrot.lane.b32.xlu0 %v267, 64
    %v931 = vpop.permute.xlu0 %930
    %v932 = vsel %vm348, %v925, 0
    %v934 = vsel %vm348, %v927, 0
    %v936 = vsel %vm348, %v929, 0
    %v938 = vsel %vm348, %v931, 0
    %940 = vmatprep.subr.mxu0 0.0
    %941 = vmatpush1.xpose.msra.mxu0 %v936
    %942 = vmatprep.subr.mxu0 0.0
    %943 = vmatpush1.xpose.msra.mxu0 %v938
    %944 = vmatprep.subr.mxu0 0.0
    %945 = vmatpush1.xpose.msra.mxu0 0.0
    %946 = vmatprep.subr.mxu0 0.0
    %947 = vmatpush1.xpose.msra.mxu0 0.0
    %948 = vmatprep.subr.mxu0 0.0
    %949 = vmatpush1.xpose.msra.mxu0 0.0
    %950 = vmatprep.subr.mxu0 0.0
    %951 = vmatpush1.xpose.msra.mxu0 0.0
    %952 = vmatprep.subr.mxu0 0.0
    %953 = vmatpush1.xpose.msra.mxu0 0.0
    %954 = vmatprep.subr.mxu0 0.0
    %955 = vmatpush1.xpose.msra.mxu0 0.0
    %956 = vmatprep.subr.mxu0 0.0
    %957 = vmatpush1.xpose.msra.mxu0 0.0
    %958 = vmatprep.subr.mxu0 0.0
    %959 = vmatpush1.xpose.msra.mxu0 0.0
    %960 = vmatprep.subr.mxu0 0.0
    %961 = vmatpush1.xpose.msra.mxu0 0.0
    %962 = vmatprep.subr.mxu0 0.0
    %963 = vmatpush1.xpose.msra.mxu0 0.0
    %964 = vmatprep.subr.mxu0 0.0
    %965 = vmatpush1.xpose.msra.mxu0 0.0
    %966 = vmatprep.subr.mxu0 0.0
    %967 = vmatpush1.xpose.msra.mxu0 0.0
    %968 = vmatprep.subr.mxu0 0.0
    %969 = vmatpush1.xpose.msra.mxu0 0.0
    %970 = vmatprep.subr.mxu0 0.0
    %971 = vmatpush1.xpose.msra.mxu0 0.0
    %972 = vmatprep.subr.mxu0 0.0
    %973 = vmatpush1.xpose.msra.mxu0 0.0
    %974 = vmatprep.subr.mxu0 0.0
    %975 = vmatpush1.xpose.msra.mxu0 0.0
    %976 = vmatprep.subr.mxu0 0.0
    %977 = vmatpush1.xpose.msra.mxu0 0.0
    %978 = vmatprep.subr.mxu0 0.0
    %979 = vmatpush1.xpose.msra.mxu0 0.0
    %980 = vmatprep.subr.mxu0 0.0
    %981 = vmatpush1.xpose.msra.mxu0 0.0
    %982 = vmatprep.subr.mxu0 0.0
    %983 = vmatpush1.xpose.msra.mxu0 0.0
    %984 = vmatprep.subr.mxu0 0.0
    %985 = vmatpush1.xpose.msra.mxu0 0.0
    %986 = vmatprep.subr.mxu0 0.0
    %987 = vmatpush1.xpose.msra.mxu0 0.0
    %988 = vmatprep.subr.mxu0 0.0
    %989 = vmatpush1.xpose.msra.mxu0 0.0
    %990 = vmatprep.subr.mxu0 0.0
    %991 = vmatpush1.xpose.msra.mxu0 0.0
    %992 = vmatprep.subr.mxu0 0.0
    %993 = vmatpush1.xpose.msra.mxu0 0.0
    %994 = vmatprep.subr.mxu0 0.0
    %995 = vmatpush1.xpose.msra.mxu0 0.0
    %996 = vmatprep.subr.mxu0 0.0
    %997 = vmatpush1.xpose.msra.mxu0 0.0
    %998 = vmatprep.subr.mxu0 0.0
    %999 = vmatpush1.xpose.msra.mxu0 0.0
    %1000 = vmatprep.subr.mxu0 0.0
    %1001 = vmatpush1.xpose.msra.mxu0 0.0
    %1002 = vmatprep.subr.mxu0 0.0
    %1003 = vmatpush1.xpose.msra.mxu0 0.0
    %1004 = vmatprep.mubr.f32.mxu0 0.0
    %1005 = vmatmul.mubr.f32.gmra.mrb[0].mxu0 %v932
    %v1006 = vpop.f32.mrb[0].mxu0
    %v1007 = vadd.f32 0.0, %v1006
    %v1008 = vpop.f32.mrb[0].mxu0
    %1009 = vmatprep.mubr.f32.mxu0 0.0
    %1010 = vmatmul.mubr.f32.gmra.mrb[0].mxu0 %v934
    %v1011 = vpop.f32.mrb[0].mxu0
    %v1012 = vadd.f32 0.0, %v1011
    %v1013 = vpop.f32.mrb[0].mxu0
    %1014 = vdwg.mxu0
    %v1015 = vmul.f32 %v1007, 0.17677669
    %v1016 = vmul.f32 %v1012, 0.17677669
    %v1017 = vadd.f32 %v1015, %v117
    %v1018 = vadd.f32 %v1016, %v118
    %v1019 = vsel %vm440, %v1017, -inf
    %1020 = vmax.xlane.f32.xlu0 %v1019
    %v1021 = vpop.xlane.xlu0 %1020
    %v1022 = vsel %vm440, %v1018, -inf
    %1023 = vmax.xlane.f32.xlu0 %v1022
    %v1024 = vpop.xlane.xlu0 %1023
    %v1025 = vsub.f32 %v1017, %v1021
    %v1026 = vsub.f32 %v1018, %v1024
    %v1027 = vmul.f32 %v1025, 1.442695
    %v1028 = vpow.pop %v1027
    %v1029 = vmul.f32 %v1026, 1.442695
    %v1030 = vpow.pop %v1029
    %v1031 = vsel %vm440, %v1028, 0.0
    %1032 = vadd.xlane.f32.xlu0 %v1031
    %v1033 = vpop.xlane.xlu0 %1032
    %v1034 = vsel %vm440, %v1030, 0.0
    %1035 = vadd.xlane.f32.xlu0 %v1034
    %v1036 = vpop.xlane.xlu0 %1035
    %v1037 = vrcp.pop %v1033
    %v1038 = vrcp.pop %v1036
    %v1039 = vmul.f32 %v1028, %v1037
    %v1040 = vmul.f32 %v1030, %v1038
    %1041 = vrot.lane.b32.xlu0 %v336, 64
    %v1042 = vpop.permute.xlu0 %1041
    %1043 = vrot.lane.b32.xlu0 %v341, 64
    %v1044 = vpop.permute.xlu0 %1043
    %v1048 = vsel %vm440, %v1039, 0
    %v1051 = vsel %vm440, %v1040, 0
    %1053 = vmatprep.subr.mxu0 0.0
    %1054 = vmatpush1.msra.mxu0 %v1042
    %1055 = vmatprep.subr.mxu0 0.0
    %1056 = vmatpush1.msra.mxu0 %v1044
    %1057 = vmatprep.subr.mxu0 0.0
    %1058 = vmatpush1.msra.mxu0 0.0
    %1059 = vmatprep.subr.mxu0 0.0
    %1060 = vmatpush1.msra.mxu0 0.0
    %1061 = vmatprep.subr.mxu0 0.0
    %1062 = vmatpush1.msra.mxu0 0.0
    %1063 = vmatprep.subr.mxu0 0.0
    %1064 = vmatpush1.msra.mxu0 0.0
    %1065 = vmatprep.subr.mxu0 0.0
    %1066 = vmatpush1.msra.mxu0 0.0
    %1067 = vmatprep.subr.mxu0 0.0
    %1068 = vmatpush1.msra.mxu0 0.0
    %1069 = vmatprep.subr.mxu0 0.0
    %1070 = vmatpush1.msra.mxu0 0.0
    %1071 = vmatprep.subr.mxu0 0.0
    %1072 = vmatpush1.msra.mxu0 0.0
    %1073 = vmatprep.subr.mxu0 0.0
    %1074 = vmatpush1.msra.mxu0 0.0
    %1075 = vmatprep.subr.mxu0 0.0
    %1076 = vmatpush1.msra.mxu0 0.0
    %1077 = vmatprep.subr.mxu0 0.0
    %1078 = vmatpush1.msra.mxu0 0.0
    %1079 = vmatprep.subr.mxu0 0.0
    %1080 = vmatpush1.msra.mxu0 0.0
    %1081 = vmatprep.subr.mxu0 0.0
    %1082 = vmatpush1.msra.mxu0 0.0
    %1083 = vmatprep.subr.mxu0 0.0
    %1084 = vmatpush1.msra.mxu0 0.0
    %1085 = vmatprep.subr.mxu0 0.0
    %1086 = vmatpush1.msra.mxu0 0.0
    %1087 = vmatprep.subr.mxu0 0.0
    %1088 = vmatpush1.msra.mxu0 0.0
    %1089 = vmatprep.subr.mxu0 0.0
    %1090 = vmatpush1.msra.mxu0 0.0
    %1091 = vmatprep.subr.mxu0 0.0
    %1092 = vmatpush1.msra.mxu0 0.0
    %1093 = vmatprep.subr.mxu0 0.0
    %1094 = vmatpush1.msra.mxu0 0.0
    %1095 = vmatprep.subr.mxu0 0.0
    %1096 = vmatpush1.msra.mxu0 0.0
    %1097 = vmatprep.subr.mxu0 0.0
    %1098 = vmatpush1.msra.mxu0 0.0
    %1099 = vmatprep.subr.mxu0 0.0
    %1100 = vmatpush1.msra.mxu0 0.0
    %1101 = vmatprep.subr.mxu0 0.0
    %1102 = vmatpush1.msra.mxu0 0.0
    %1103 = vmatprep.subr.mxu0 0.0
    %1104 = vmatpush1.msra.mxu0 0.0
    %1105 = vmatprep.subr.mxu0 0.0
    %1106 = vmatpush1.msra.mxu0 0.0
    %1107 = vmatprep.subr.mxu0 0.0
    %1108 = vmatpush1.msra.mxu0 0.0
    %1109 = vmatprep.subr.mxu0 0.0
    %1110 = vmatpush1.msra.mxu0 0.0
    %1111 = vmatprep.subr.mxu0 0.0
    %1112 = vmatpush1.msra.mxu0 0.0
    %1113 = vmatprep.subr.mxu0 0.0
    %1114 = vmatpush1.msra.mxu0 0.0
    %1115 = vmatprep.subr.mxu0 0.0
    %1116 = vmatpush1.msra.mxu0 0.0
    %1117 = vmatprep.mubr.f32.mxu0 0.0
    %1118 = vmatmul.mubr.f32.gmra.mrb[0].mxu0 %v1048
    %v1119 = vpop.f32.mrb[0].mxu0
    %v1120 = vadd.f32 0.0, %v1119
    %v1121 = vpop.f32.mrb[0].mxu0
    %1122 = vmatprep.mubr.f32.mxu0 0.0
    %1123 = vmatmul.mubr.f32.gmra.mrb[0].mxu0 %v1051
    %v1124 = vpop.f32.mrb[0].mxu0
    %v1125 = vadd.f32 0.0, %v1124
    %v1126 = vpop.f32.mrb[0].mxu0
    %1127 = vdwg.mxu0
    %v1128 = vld [vmem:[#allocation8 + $0x40] sm:$0xff]
    %v1129 = vld [vmem:[#allocation8 + $0x48] sm:$0xff]
    %v1130 = vld [vmem:[#allocation8 + $0x50] sm:$0xff]
    %v1131 = vld [vmem:[#allocation8 + $0x58] sm:$0xff]
    %v1133 = vsel %vm348, %v1120, 0
    %v1136 = vsel %vm348, %v1125, 0
    %1138 = vmatprep.subr.mxu0 0.0
    %1139 = vmatpush1.msra.mxu0 %v1128
    %1140 = vmatprep.subr.mxu0 0.0
    %1141 = vmatpush1.msra.mxu0 %v1129
    %1142 = vmatprep.subr.mxu0 0.0
    %1143 = vmatpush1.msra.mxu0 %v1130
    %1144 = vmatprep.subr.mxu0 0.0
    %1145 = vmatpush1.msra.mxu0 %v1131
    %1146 = vmatprep.subr.mxu0 0.0
    %1147 = vmatpush1.msra.mxu0 0.0
    %1148 = vmatprep.subr.mxu0 0.0
    %1149 = vmatpush1.msra.mxu0 0.0
    %1150 = vmatprep.subr.mxu0 0.0
    %1151 = vmatpush1.msra.mxu0 0.0
    %1152 = vmatprep.subr.mxu0 0.0
    %1153 = vmatpush1.msra.mxu0 0.0
    %1154 = vmatprep.subr.mxu0 0.0
    %1155 = vmatpush1.msra.mxu0 0.0
    %1156 = vmatprep.subr.mxu0 0.0
    %1157 = vmatpush1.msra.mxu0 0.0
    %1158 = vmatprep.subr.mxu0 0.0
    %1159 = vmatpush1.msra.mxu0 0.0
    %1160 = vmatprep.subr.mxu0 0.0
    %1161 = vmatpush1.msra.mxu0 0.0
    %1162 = vmatprep.subr.mxu0 0.0
    %1163 = vmatpush1.msra.mxu0 0.0
    %1164 = vmatprep.subr.mxu0 0.0
    %1165 = vmatpush1.msra.mxu0 0.0
    %1166 = vmatprep.subr.mxu0 0.0
    %1167 = vmatpush1.msra.mxu0 0.0
    %1168 = vmatprep.subr.mxu0 0.0
    %1169 = vmatpush1.msra.mxu0 0.0
    %1170 = vmatprep.subr.mxu0 0.0
    %1171 = vmatpush1.msra.mxu0 0.0
    %1172 = vmatprep.subr.mxu0 0.0
    %1173 = vmatpush1.msra.mxu0 0.0
    %1174 = vmatprep.subr.mxu0 0.0
    %1175 = vmatpush1.msra.mxu0 0.0
    %1176 = vmatprep.subr.mxu0 0.0
    %1177 = vmatpush1.msra.mxu0 0.0
    %1178 = vmatprep.subr.mxu0 0.0
    %1179 = vmatpush1.msra.mxu0 0.0
    %1180 = vmatprep.subr.mxu0 0.0
    %1181 = vmatpush1.msra.mxu0 0.0
    %1182 = vmatprep.subr.mxu0 0.0
    %1183 = vmatpush1.msra.mxu0 0.0
    %1184 = vmatprep.subr.mxu0 0.0
    %1185 = vmatpush1.msra.mxu0 0.0
    %1186 = vmatprep.subr.mxu0 0.0
    %1187 = vmatpush1.msra.mxu0 0.0
    %1188 = vmatprep.subr.mxu0 0.0
    %1189 = vmatpush1.msra.mxu0 0.0
    %1190 = vmatprep.subr.mxu0 0.0
    %1191 = vmatpush1.msra.mxu0 0.0
    %1192 = vmatprep.subr.mxu0 0.0
    %1193 = vmatpush1.msra.mxu0 0.0
    %1194 = vmatprep.subr.mxu0 0.0
    %1195 = vmatpush1.msra.mxu0 0.0
    %1196 = vmatprep.subr.mxu0 0.0
    %1197 = vmatpush1.msra.mxu0 0.0
    %1198 = vmatprep.subr.mxu0 0.0
    %1199 = vmatpush1.msra.mxu0 0.0
    %1200 = vmatprep.subr.mxu0 0.0
    %1201 = vmatpush1.msra.mxu0 0.0
    %1202 = vmatprep.mubr.f32.mxu0 0.0
    %1203 = vmatmul.mubr.f32.gmra.mrb[0].mxu0 %v1133
    %v1204 = vpop.f32.mrb[0].mxu0
    %v1205 = vadd.f32 0.0, %v1204
    %v1206 = vpop.f32.mrb[0].mxu0
    %1207 = vmatprep.mubr.f32.mxu0 0.0
    %1208 = vmatmul.mubr.f32.gmra.mrb[0].mxu0 %v1136
    %v1209 = vpop.f32.mrb[0].mxu0
    %v1210 = vadd.f32 0.0, %v1209
    %v1211 = vpop.f32.mrb[0].mxu0
    %1212 = vdwg.mxu0
    %v1213 = vadd.f32 %v922, %v1205
    %v1214 = vadd.f32 %v923, %v1210
    %1215 = vrot.lane.b32.xlu0 %v259, 32
    %v1216 = vpop.permute.xlu0 %1215
    %1217 = vrot.lane.b32.xlu0 %v265, 32
    %v1218 = vpop.permute.xlu0 %1217
    %1219 = vrot.lane.b32.xlu0 %v261, 32
    %v1220 = vpop.permute.xlu0 %1219
    %1221 = vrot.lane.b32.xlu0 %v267, 32
    %v1222 = vpop.permute.xlu0 %1221
    %v1223 = vsel %vm348, %v1216, 0
    %v1225 = vsel %vm348, %v1218, 0
    %v1227 = vsel %vm348, %v1220, 0
    %v1229 = vsel %vm348, %v1222, 0
    %1231 = vmatprep.subr.mxu0 0.0
    %1232 = vmatpush1.xpose.msra.mxu0 %v1227
    %1233 = vmatprep.subr.mxu0 0.0
    %1234 = vmatpush1.xpose.msra.mxu0 %v1229
    %1235 = vmatprep.subr.mxu0 0.0
    %1236 = vmatpush1.xpose.msra.mxu0 0.0
    %1237 = vmatprep.subr.mxu0 0.0
    %1238 = vmatpush1.xpose.msra.mxu0 0.0
    %1239 = vmatprep.subr.mxu0 0.0
    %1240 = vmatpush1.xpose.msra.mxu0 0.0
    %1241 = vmatprep.subr.mxu0 0.0
    %1242 = vmatpush1.xpose.msra.mxu0 0.0
    %1243 = vmatprep.subr.mxu0 0.0
    %1244 = vmatpush1.xpose.msra.mxu0 0.0
    %1245 = vmatprep.subr.mxu0 0.0
    %1246 = vmatpush1.xpose.msra.mxu0 0.0
    %1247 = vmatprep.subr.mxu0 0.0
    %1248 = vmatpush1.xpose.msra.mxu0 0.0
    %1249 = vmatprep.subr.mxu0 0.0
    %1250 = vmatpush1.xpose.msra.mxu0 0.0
    %1251 = vmatprep.subr.mxu0 0.0
    %1252 = vmatpush1.xpose.msra.mxu0 0.0
    %1253 = vmatprep.subr.mxu0 0.0
    %1254 = vmatpush1.xpose.msra.mxu0 0.0
    %1255 = vmatprep.subr.mxu0 0.0
    %1256 = vmatpush1.xpose.msra.mxu0 0.0
    %1257 = vmatprep.subr.mxu0 0.0
    %1258 = vmatpush1.xpose.msra.mxu0 0.0
    %1259 = vmatprep.subr.mxu0 0.0
    %1260 = vmatpush1.xpose.msra.mxu0 0.0
    %1261 = vmatprep.subr.mxu0 0.0
    %1262 = vmatpush1.xpose.msra.mxu0 0.0
    %1263 = vmatprep.subr.mxu0 0.0
    %1264 = vmatpush1.xpose.msra.mxu0 0.0
    %1265 = vmatprep.subr.mxu0 0.0
    %1266 = vmatpush1.xpose.msra.mxu0 0.0
    %1267 = vmatprep.subr.mxu0 0.0
    %1268 = vmatpush1.xpose.msra.mxu0 0.0
    %1269 = vmatprep.subr.mxu0 0.0
    %1270 = vmatpush1.xpose.msra.mxu0 0.0
    %1271 = vmatprep.subr.mxu0 0.0
    %1272 = vmatpush1.xpose.msra.mxu0 0.0
    %1273 = vmatprep.subr.mxu0 0.0
    %1274 = vmatpush1.xpose.msra.mxu0 0.0
    %1275 = vmatprep.subr.mxu0 0.0
    %1276 = vmatpush1.xpose.msra.mxu0 0.0
    %1277 = vmatprep.subr.mxu0 0.0
    %1278 = vmatpush1.xpose.msra.mxu0 0.0
    %1279 = vmatprep.subr.mxu0 0.0
    %1280 = vmatpush1.xpose.msra.mxu0 0.0
    %1281 = vmatprep.subr.mxu0 0.0
    %1282 = vmatpush1.xpose.msra.mxu0 0.0
    %1283 = vmatprep.subr.mxu0 0.0
    %1284 = vmatpush1.xpose.msra.mxu0 0.0
    %1285 = vmatprep.subr.mxu0 0.0
    %1286 = vmatpush1.xpose.msra.mxu0 0.0
    %1287 = vmatprep.subr.mxu0 0.0
    %1288 = vmatpush1.xpose.msra.mxu0 0.0
    %1289 = vmatprep.subr.mxu0 0.0
    %1290 = vmatpush1.xpose.msra.mxu0 0.0
    %1291 = vmatprep.subr.mxu0 0.0
    %1292 = vmatpush1.xpose.msra.mxu0 0.0
    %1293 = vmatprep.subr.mxu0 0.0
    %1294 = vmatpush1.xpose.msra.mxu0 0.0
    %1295 = vmatprep.mubr.f32.mxu0 0.0
    %1296 = vmatmul.mubr.f32.gmra.mrb[0].mxu0 %v1223
    %v1297 = vpop.f32.mrb[0].mxu0
    %v1298 = vadd.f32 0.0, %v1297
    %v1299 = vpop.f32.mrb[0].mxu0
    %1300 = vmatprep.mubr.f32.mxu0 0.0
    %1301 = vmatmul.mubr.f32.gmra.mrb[0].mxu0 %v1225
    %v1302 = vpop.f32.mrb[0].mxu0
    %v1303 = vadd.f32 0.0, %v1302
    %v1304 = vpop.f32.mrb[0].mxu0
    %1305 = vdwg.mxu0
    %v1306 = vmul.f32 %v1298, 0.17677669
    %v1307 = vmul.f32 %v1303, 0.17677669
    %v1308 = vadd.f32 %v1306, %v117
    %v1309 = vadd.f32 %v1307, %v118
    %v1310 = vsel %vm440, %v1308, -inf
    %1311 = vmax.xlane.f32.xlu0 %v1310
    %v1312 = vpop.xlane.xlu0 %1311
    %v1313 = vsel %vm440, %v1309, -inf
    %1314 = vmax.xlane.f32.xlu0 %v1313
    %v1315 = vpop.xlane.xlu0 %1314
    %v1316 = vsub.f32 %v1308, %v1312
    %v1317 = vsub.f32 %v1309, %v1315
    %v1318 = vmul.f32 %v1316, 1.442695
    %v1319 = vpow.pop %v1318
    %v1320 = vmul.f32 %v1317, 1.442695
    %v1321 = vpow.pop %v1320
    %v1322 = vsel %vm440, %v1319, 0.0
    %1323 = vadd.xlane.f32.xlu0 %v1322
    %v1324 = vpop.xlane.xlu0 %1323
    %v1325 = vsel %vm440, %v1321, 0.0
    %1326 = vadd.xlane.f32.xlu0 %v1325
    %v1327 = vpop.xlane.xlu0 %1326
    %v1328 = vrcp.pop %v1324
    %v1329 = vrcp.pop %v1327
    %v1330 = vmul.f32 %v1319, %v1328
    %v1331 = vmul.f32 %v1321, %v1329
    %1332 = vrot.lane.b32.xlu0 %v336, 32
    %v1333 = vpop.permute.xlu0 %1332
    %1334 = vrot.lane.b32.xlu0 %v341, 32
    %v1335 = vpop.permute.xlu0 %1334
    %v1339 = vsel %vm440, %v1330, 0
    %v1342 = vsel %vm440, %v1331, 0
    %1344 = vmatprep.subr.mxu0 0.0
    %1345 = vmatpush1.msra.mxu0 %v1333
    %1346 = vmatprep.subr.mxu0 0.0
    %1347 = vmatpush1.msra.mxu0 %v1335
    %1348 = vmatprep.subr.mxu0 0.0
    %1349 = vmatpush1.msra.mxu0 0.0
    %1350 = vmatprep.subr.mxu0 0.0
    %1351 = vmatpush1.msra.mxu0 0.0
    %1352 = vmatprep.subr.mxu0 0.0
    %1353 = vmatpush1.msra.mxu0 0.0
    %1354 = vmatprep.subr.mxu0 0.0
    %1355 = vmatpush1.msra.mxu0 0.0
    %1356 = vmatprep.subr.mxu0 0.0
    %1357 = vmatpush1.msra.mxu0 0.0
    %1358 = vmatprep.subr.mxu0 0.0
    %1359 = vmatpush1.msra.mxu0 0.0
    %1360 = vmatprep.subr.mxu0 0.0
    %1361 = vmatpush1.msra.mxu0 0.0
    %1362 = vmatprep.subr.mxu0 0.0
    %1363 = vmatpush1.msra.mxu0 0.0
    %1364 = vmatprep.subr.mxu0 0.0
    %1365 = vmatpush1.msra.mxu0 0.0
    %1366 = vmatprep.subr.mxu0 0.0
    %1367 = vmatpush1.msra.mxu0 0.0
    %1368 = vmatprep.subr.mxu0 0.0
    %1369 = vmatpush1.msra.mxu0 0.0
    %1370 = vmatprep.subr.mxu0 0.0
    %1371 = vmatpush1.msra.mxu0 0.0
    %1372 = vmatprep.subr.mxu0 0.0
    %1373 = vmatpush1.msra.mxu0 0.0
    %1374 = vmatprep.subr.mxu0 0.0
    %1375 = vmatpush1.msra.mxu0 0.0
    %1376 = vmatprep.subr.mxu0 0.0
    %1377 = vmatpush1.msra.mxu0 0.0
    %1378 = vmatprep.subr.mxu0 0.0
    %1379 = vmatpush1.msra.mxu0 0.0
    %1380 = vmatprep.subr.mxu0 0.0
    %1381 = vmatpush1.msra.mxu0 0.0
    %1382 = vmatprep.subr.mxu0 0.0
    %1383 = vmatpush1.msra.mxu0 0.0
    %1384 = vmatprep.subr.mxu0 0.0
    %1385 = vmatpush1.msra.mxu0 0.0
    %1386 = vmatprep.subr.mxu0 0.0
    %1387 = vmatpush1.msra.mxu0 0.0
    %1388 = vmatprep.subr.mxu0 0.0
    %1389 = vmatpush1.msra.mxu0 0.0
    %1390 = vmatprep.subr.mxu0 0.0
    %1391 = vmatpush1.msra.mxu0 0.0
    %1392 = vmatprep.subr.mxu0 0.0
    %1393 = vmatpush1.msra.mxu0 0.0
    %1394 = vmatprep.subr.mxu0 0.0
    %1395 = vmatpush1.msra.mxu0 0.0
    %1396 = vmatprep.subr.mxu0 0.0
    %1397 = vmatpush1.msra.mxu0 0.0
    %1398 = vmatprep.subr.mxu0 0.0
    %1399 = vmatpush1.msra.mxu0 0.0
    %1400 = vmatprep.subr.mxu0 0.0
    %1401 = vmatpush1.msra.mxu0 0.0
    %1402 = vmatprep.subr.mxu0 0.0
    %1403 = vmatpush1.msra.mxu0 0.0
    %1404 = vmatprep.subr.mxu0 0.0
    %1405 = vmatpush1.msra.mxu0 0.0
    %1406 = vmatprep.subr.mxu0 0.0
    %1407 = vmatpush1.msra.mxu0 0.0
    %1408 = vmatprep.mubr.f32.mxu0 0.0
    %1409 = vmatmul.mubr.f32.gmra.mrb[0].mxu0 %v1339
    %v1410 = vpop.f32.mrb[0].mxu0
    %v1411 = vadd.f32 0.0, %v1410
    %v1412 = vpop.f32.mrb[0].mxu0
    %1413 = vmatprep.mubr.f32.mxu0 0.0
    %1414 = vmatmul.mubr.f32.gmra.mrb[0].mxu0 %v1342
    %v1415 = vpop.f32.mrb[0].mxu0
    %v1416 = vadd.f32 0.0, %v1415
    %v1417 = vpop.f32.mrb[0].mxu0
    %1418 = vdwg.mxu0
    %v1419 = vld [vmem:[#allocation8 + $0x60] sm:$0xff]
    %v1420 = vld [vmem:[#allocation8 + $0x68] sm:$0xff]
    %v1421 = vld [vmem:[#allocation8 + $0x70] sm:$0xff]
    %v1422 = vld [vmem:[#allocation8 + $0x78] sm:$0xff]
    %v1424 = vsel %vm348, %v1411, 0
    %v1427 = vsel %vm348, %v1416, 0
    %1429 = vmatprep.subr.mxu0 0.0
    %1430 = vmatpush1.msra.mxu0 %v1419
    %1431 = vmatprep.subr.mxu0 0.0
    %1432 = vmatpush1.msra.mxu0 %v1420
    %1433 = vmatprep.subr.mxu0 0.0
    %1434 = vmatpush1.msra.mxu0 %v1421
    %1435 = vmatprep.subr.mxu0 0.0
    %1436 = vmatpush1.msra.mxu0 %v1422
    %1437 = vmatprep.subr.mxu0 0.0
    %1438 = vmatpush1.msra.mxu0 0.0
    %1439 = vmatprep.subr.mxu0 0.0
    %1440 = vmatpush1.msra.mxu0 0.0
    %1441 = vmatprep.subr.mxu0 0.0
    %1442 = vmatpush1.msra.mxu0 0.0
    %1443 = vmatprep.subr.mxu0 0.0
    %1444 = vmatpush1.msra.mxu0 0.0
    %1445 = vmatprep.subr.mxu0 0.0
    %1446 = vmatpush1.msra.mxu0 0.0
    %1447 = vmatprep.subr.mxu0 0.0
    %1448 = vmatpush1.msra.mxu0 0.0
    %1449 = vmatprep.subr.mxu0 0.0
    %1450 = vmatpush1.msra.mxu0 0.0
    %1451 = vmatprep.subr.mxu0 0.0
    %1452 = vmatpush1.msra.mxu0 0.0
    %1453 = vmatprep.subr.mxu0 0.0
    %1454 = vmatpush1.msra.mxu0 0.0
    %1455 = vmatprep.subr.mxu0 0.0
    %1456 = vmatpush1.msra.mxu0 0.0
    %1457 = vmatprep.subr.mxu0 0.0
    %1458 = vmatpush1.msra.mxu0 0.0
    %1459 = vmatprep.subr.mxu0 0.0
    %1460 = vmatpush1.msra.mxu0 0.0
    %1461 = vmatprep.subr.mxu0 0.0
    %1462 = vmatpush1.msra.mxu0 0.0
    %1463 = vmatprep.subr.mxu0 0.0
    %1464 = vmatpush1.msra.mxu0 0.0
    %1465 = vmatprep.subr.mxu0 0.0
    %1466 = vmatpush1.msra.mxu0 0.0
    %1467 = vmatprep.subr.mxu0 0.0
    %1468 = vmatpush1.msra.mxu0 0.0
    %1469 = vmatprep.subr.mxu0 0.0
    %1470 = vmatpush1.msra.mxu0 0.0
    %1471 = vmatprep.subr.mxu0 0.0
    %1472 = vmatpush1.msra.mxu0 0.0
    %1473 = vmatprep.subr.mxu0 0.0
    %1474 = vmatpush1.msra.mxu0 0.0
    %1475 = vmatprep.subr.mxu0 0.0
    %1476 = vmatpush1.msra.mxu0 0.0
    %1477 = vmatprep.subr.mxu0 0.0
    %1478 = vmatpush1.msra.mxu0 0.0
    %1479 = vmatprep.subr.mxu0 0.0
    %1480 = vmatpush1.msra.mxu0 0.0
    %1481 = vmatprep.subr.mxu0 0.0
    %1482 = vmatpush1.msra.mxu0 0.0
    %1483 = vmatprep.subr.mxu0 0.0
    %1484 = vmatpush1.msra.mxu0 0.0
    %1485 = vmatprep.subr.mxu0 0.0
    %1486 = vmatpush1.msra.mxu0 0.0
    %1487 = vmatprep.subr.mxu0 0.0
    %1488 = vmatpush1.msra.mxu0 0.0
    %1489 = vmatprep.subr.mxu0 0.0
    %1490 = vmatpush1.msra.mxu0 0.0
    %1491 = vmatprep.subr.mxu0 0.0
    %1492 = vmatpush1.msra.mxu0 0.0
    %1493 = vmatprep.mubr.f32.mxu0 0.0
    %1494 = vmatmul.mubr.f32.gmra.mrb[0].mxu0 %v1424
    %v1495 = vpop.f32.mrb[0].mxu0
    %v1496 = vadd.f32 0.0, %v1495
    %v1497 = vpop.f32.mrb[0].mxu0
    %1498 = vmatprep.mubr.f32.mxu0 0.0
    %1499 = vmatmul.mubr.f32.gmra.mrb[0].mxu0 %v1427
    %v1500 = vpop.f32.mrb[0].mxu0
    %v1501 = vadd.f32 0.0, %v1500
    %v1502 = vpop.f32.mrb[0].mxu0
    %1503 = vdwg.mxu0
    %v1504 = vadd.f32 %v1213, %v1496
    %v1505 = vadd.f32 %v1214, %v1501
    %v1506 = vadd.f32 %v1504, %v115
    %v1507 = vadd.f32 %v1505, %v116
    %1508 = vadd.xlane.f32.xlu0 %v1506
    %v1509 = vpop.xlane.xlu0 %1508
    %1510 = vadd.xlane.f32.xlu0 %v1507
    %v1511 = vpop.xlane.xlu0 %1510
    %v1512 = vrcp.pop 128.0
    %v1513 = vmul.f32 %v1509, %v1512
    %v1514 = vmul.f32 %v1511, %v1512
    %v1515 = vsub.f32 %v1506, %v1513
    %v1516 = vsub.f32 %v1507, %v1514
    %v1517 = vmul.f32 %v1515, %v1515
    %v1518 = vmul.f32 %v1516, %v1516
    %1519 = vadd.xlane.f32.xlu0 %v1517
    %v1520 = vpop.xlane.xlu0 %1519
    %1521 = vadd.xlane.f32.xlu0 %v1518
    %v1522 = vpop.xlane.xlu0 %1521
    %v1523 = vmul.f32 %v1520, %v1512
    %v1524 = vmul.f32 %v1522, %v1512
    %v1525 = vadd.f32 %v1523, 1e-05
    %v1526 = vadd.f32 %v1524, 1e-05
    %v1527 = vrsqrt.pop %v1525
    %v1528 = vrsqrt.pop %v1526
    %v1529 = vmul.f32 %v1515, %v1527
    %v1530 = vmul.f32 %v1516, %v1528
    %v1531 = vlaneseq
    %v1532 = vshrl.u32 %v1531, 7
    %v1533 = vsub.s32 0, %v1532
    %v1534 = vrot.slane %v120, %v1533
    %v1535 = vmul.f32 %v1529, %v1534
    %v1536 = vmul.f32 %v1530, %v1534
    %v1537 = vlaneseq
    %v1538 = vshrl.u32 %v1537, 7
    %v1539 = vsub.s32 0, %v1538
    %v1540 = vrot.slane %v121, %v1539
    %v1541 = vadd.f32 %v1535, %v1540
    %v1542 = vadd.f32 %v1536, %v1540
    %v1543 = vadd.f32 %v115, %v1541
    %v1544 = vadd.f32 %v116, %v1542
    %1545 = vadd.xlane.f32.xlu0 %v1543
    %v1546 = vpop.xlane.xlu0 %1545
    %1547 = vadd.xlane.f32.xlu0 %v1544
    %v1548 = vpop.xlane.xlu0 %1547
    %v1549 = vmul.f32 %v1546, %v1512
    %v1550 = vmul.f32 %v1548, %v1512
    %v1551 = vsub.f32 %v1543, %v1549
    %v1552 = vsub.f32 %v1544, %v1550
    %v1553 = vmul.f32 %v1551, %v1551
    %v1554 = vmul.f32 %v1552, %v1552
    %1555 = vadd.xlane.f32.xlu0 %v1553
    %v1556 = vpop.xlane.xlu0 %1555
    %1557 = vadd.xlane.f32.xlu0 %v1554
    %v1558 = vpop.xlane.xlu0 %1557
    %v1559 = vmul.f32 %v1556, %v1512
    %v1560 = vmul.f32 %v1558, %v1512
    %v1561 = vadd.f32 %v1559, 1e-05
    %v1562 = vadd.f32 %v1560, 1e-05
    %v1563 = vrsqrt.pop %v1561
    %v1564 = vrsqrt.pop %v1562
    %v1565 = vmul.f32 %v1551, %v1563
    %v1566 = vmul.f32 %v1552, %v1564
    %v1567 = vlaneseq
    %v1568 = vshrl.u32 %v1567, 7
    %v1569 = vsub.s32 0, %v1568
    %v1570 = vrot.slane %v122, %v1569
    %v1571 = vmul.f32 %v1565, %v1570
    %v1572 = vmul.f32 %v1566, %v1570
    %v1573 = vlaneseq
    %v1574 = vshrl.u32 %v1573, 7
    %v1575 = vsub.s32 0, %v1574
    %v1576 = vrot.slane %v123, %v1575
    %v1577 = vadd.f32 %v1571, %v1576
    %v1578 = vadd.f32 %v1572, %v1576
    %v1579 = vld [vmem:[#allocation10] sm:$0xff]
    %v1580 = vld [vmem:[#allocation10 + $0x8] sm:$0xff]
    %v1581 = vld [vmem:[#allocation10 + $0x10] sm:$0xff]
    %v1582 = vld [vmem:[#allocation10 + $0x18] sm:$0xff]
    %v1583 = vld [vmem:[#allocation10 + $0x20] sm:$0xff]
    %v1584 = vld [vmem:[#allocation10 + $0x28] sm:$0xff]
    %v1585 = vld [vmem:[#allocation10 + $0x30] sm:$0xff]
    %v1586 = vld [vmem:[#allocation10 + $0x38] sm:$0xff]
    %v1587 = vld [vmem:[#allocation10 + $0x40] sm:$0xff]
    %v1588 = vld [vmem:[#allocation10 + $0x48] sm:$0xff]
    %v1589 = vld [vmem:[#allocation10 + $0x50] sm:$0xff]
    %v1590 = vld [vmem:[#allocation10 + $0x58] sm:$0xff]
    %v1591 = vld [vmem:[#allocation10 + $0x60] sm:$0xff]
    %v1592 = vld [vmem:[#allocation10 + $0x68] sm:$0xff]
    %v1593 = vld [vmem:[#allocation10 + $0x70] sm:$0xff]
    %v1594 = vld [vmem:[#allocation10 + $0x78] sm:$0xff]
    %v1595 = vld [vmem:[#allocation10 + $0x80] sm:$0xff]
    %v1596 = vld [vmem:[#allocation10 + $0x88] sm:$0xff]
    %v1597 = vld [vmem:[#allocation10 + $0x90] sm:$0xff]
    %v1598 = vld [vmem:[#allocation10 + $0x98] sm:$0xff]
    %v1599 = vld [vmem:[#allocation10 + $0xa0] sm:$0xff]
    %v1600 = vld [vmem:[#allocation10 + $0xa8] sm:$0xff]
    %v1601 = vld [vmem:[#allocation10 + $0xb0] sm:$0xff]
    %v1602 = vld [vmem:[#allocation10 + $0xb8] sm:$0xff]
    %v1603 = vld [vmem:[#allocation10 + $0xc0] sm:$0xff]
    %v1604 = vld [vmem:[#allocation10 + $0xc8] sm:$0xff]
    %v1605 = vld [vmem:[#allocation10 + $0xd0] sm:$0xff]
    %v1606 = vld [vmem:[#allocation10 + $0xd8] sm:$0xff]
    %v1607 = vld [vmem:[#allocation10 + $0xe0] sm:$0xff]
    %v1608 = vld [vmem:[#allocation10 + $0xe8] sm:$0xff]
    %v1609 = vld [vmem:[#allocation10 + $0xf0] sm:$0xff]
    %v1610 = vld [vmem:[#allocation10 + $0xf8] sm:$0xff]
    %v1611 = vld [vmem:[%s6] sm:$0x3]
    %v1613 = vlaneseq
    %v1614 = vshrl.u32 %v1613, 7
    %v1615 = vsub.s32 0, %v1614
    %v1616 = vrot.slane %v1611, %v1615
    %v1617 = vlaneseq
    %v1618 = vshrl.u32 %v1617, 7
    %v1619 = vsub.s32 1, %v1618
    %v1620 = vrot.slane %v1611, %v1619
    %1623 = vmatprep.subr.mxu0 %v1580
    %1624 = vmatpush1.msra.mxu0 %v1579
    %1625 = vmatprep.subr.mxu0 %v1582
    %1626 = vmatpush1.msra.mxu0 %v1581
    %1627 = vmatprep.subr.mxu0 %v1584
    %1628 = vmatpush1.msra.mxu0 %v1583
    %1629 = vmatprep.subr.mxu0 %v1586
    %1630 = vmatpush1.msra.mxu0 %v1585
    %1631 = vmatprep.subr.mxu0 %v1588
    %1632 = vmatpush1.msra.mxu0 %v1587
    %1633 = vmatprep.subr.mxu0 %v1590
    %1634 = vmatpush1.msra.mxu0 %v1589
    %1635 = vmatprep.subr.mxu0 %v1592
    %1636 = vmatpush1.msra.mxu0 %v1591
    %1637 = vmatprep.subr.mxu0 %v1594
    %1638 = vmatpush1.msra.mxu0 %v1593
    %1639 = vmatprep.subr.mxu0 %v1596
    %1640 = vmatpush1.msra.mxu0 %v1595
    %1641 = vmatprep.subr.mxu0 %v1598
    %1642 = vmatpush1.msra.mxu0 %v1597
    %1643 = vmatprep.subr.mxu0 %v1600
    %1644 = vmatpush1.msra.mxu0 %v1599
    %1645 = vmatprep.subr.mxu0 %v1602
    %1646 = vmatpush1.msra.mxu0 %v1601
    %1647 = vmatprep.subr.mxu0 %v1604
    %1648 = vmatpush1.msra.mxu0 %v1603
    %1649 = vmatprep.subr.mxu0 %v1606
    %1650 = vmatpush1.msra.mxu0 %v1605
    %1651 = vmatprep.subr.mxu0 %v1608
    %1652 = vmatpush1.msra.mxu0 %v1607
    %1653 = vmatprep.subr.mxu0 %v1610
    %1654 = vmatpush1.msra.mxu0 %v1609
    %1655 = vmatprep.subr.mxu0 0.0
    %1656 = vmatpush1.msra.mxu0 0.0
    %1657 = vmatprep.subr.mxu0 0.0
    %1658 = vmatpush1.msra.mxu0 0.0
    %1659 = vmatprep.subr.mxu0 0.0
    %1660 = vmatpush1.msra.mxu0 0.0
    %1661 = vmatprep.subr.mxu0 0.0
    %1662 = vmatpush1.msra.mxu0 0.0
    %1663 = vmatprep.subr.mxu0 0.0
    %1664 = vmatpush1.msra.mxu0 0.0
    %1665 = vmatprep.subr.mxu0 0.0
    %1666 = vmatpush1.msra.mxu0 0.0
    %1667 = vmatprep.subr.mxu0 0.0
    %1668 = vmatpush1.msra.mxu0 0.0
    %1669 = vmatprep.subr.mxu0 0.0
    %1670 = vmatpush1.msra.mxu0 0.0
    %1671 = vmatprep.subr.mxu0 0.0
    %1672 = vmatpush1.msra.mxu0 0.0
    %1673 = vmatprep.subr.mxu0 0.0
    %1674 = vmatpush1.msra.mxu0 0.0
    %1675 = vmatprep.subr.mxu0 0.0
    %1676 = vmatpush1.msra.mxu0 0.0
    %1677 = vmatprep.subr.mxu0 0.0
    %1678 = vmatpush1.msra.mxu0 0.0
    %1679 = vmatprep.subr.mxu0 0.0
    %1680 = vmatpush1.msra.mxu0 0.0
    %1681 = vmatprep.subr.mxu0 0.0
    %1682 = vmatpush1.msra.mxu0 0.0
    %1683 = vmatprep.subr.mxu0 0.0
    %1684 = vmatpush1.msra.mxu0 0.0
    %1685 = vmatprep.subr.mxu0 0.0
    %1686 = vmatpush1.msra.mxu0 0.0
    %1687 = vmatprep.mubr.f32.mxu0 0.0
    %1688 = vmatmul.mubr.f32.gmra.mrb[0].mxu0 %v1577
    %v1689 = vpop.f32.mrb[0].mxu0
    %v1690 = vadd.f32 %v1616, %v1689
    %v1691 = vpop.f32.mrb[0].mxu0
    %v1692 = vadd.f32 %v1620, %v1691
    %1693 = vmatprep.mubr.f32.mxu0 0.0
    %1694 = vmatmul.mubr.f32.gmra.mrb[0].mxu0 %v1578
    %v1695 = vpop.f32.mrb[0].mxu0
    %v1696 = vadd.f32 %v1616, %v1695
    %v1697 = vpop.f32.mrb[0].mxu0
    %v1698 = vadd.f32 %v1620, %v1697
    %1699 = vdwg.mxu0
    %v1700 = vmax.f32 %v1690, 0.0
    %v1701 = vmax.f32 %v1692, 0.0
    %v1702 = vmax.f32 %v1696, 0.0
    %v1703 = vmax.f32 %v1698, 0.0
    %v1704 = vld [vmem:[#allocation11] sm:$0xff]
    %v1705 = vld [vmem:[#allocation11 + $0x8] sm:$0xff]
    %v1706 = vld [vmem:[#allocation11 + $0x10] sm:$0xff]
    %v1707 = vld [vmem:[#allocation11 + $0x18] sm:$0xff]
    %v1708 = vld [vmem:[#allocation11 + $0x20] sm:$0xff]
    %v1709 = vld [vmem:[#allocation11 + $0x28] sm:$0xff]
    %v1710 = vld [vmem:[#allocation11 + $0x30] sm:$0xff]
    %v1711 = vld [vmem:[#allocation11 + $0x38] sm:$0xff]
    %v1712 = vld [vmem:[#allocation11 + $0x40] sm:$0xff]
    %v1713 = vld [vmem:[#allocation11 + $0x48] sm:$0xff]
    %v1714 = vld [vmem:[#allocation11 + $0x50] sm:$0xff]
    %v1715 = vld [vmem:[#allocation11 + $0x58] sm:$0xff]
    %v1716 = vld [vmem:[#allocation11 + $0x60] sm:$0xff]
    %v1717 = vld [vmem:[#allocation11 + $0x68] sm:$0xff]
    %v1718 = vld [vmem:[#allocation11 + $0x70] sm:$0xff]
    %v1719 = vld [vmem:[#allocation11 + $0x78] sm:$0xff]
    %v1720 = vld [vmem:[#allocation11 + $0x80] sm:$0xff]
    %v1721 = vld [vmem:[#allocation11 + $0x88] sm:$0xff]
    %v1722 = vld [vmem:[#allocation11 + $0x90] sm:$0xff]
    %v1723 = vld [vmem:[#allocation11 + $0x98] sm:$0xff]
    %v1724 = vld [vmem:[#allocation11 + $0xa0] sm:$0xff]
    %v1725 = vld [vmem:[#allocation11 + $0xa8] sm:$0xff]
    %v1726 = vld [vmem:[#allocation11 + $0xb0] sm:$0xff]
    %v1727 = vld [vmem:[#allocation11 + $0xb8] sm:$0xff]
    %v1728 = vld [vmem:[#allocation11 + $0xc0] sm:$0xff]
    %v1729 = vld [vmem:[#allocation11 + $0xc8] sm:$0xff]
    %v1730 = vld [vmem:[#allocation11 + $0xd0] sm:$0xff]
    %v1731 = vld [vmem:[#allocation11 + $0xd8] sm:$0xff]
    %v1732 = vld [vmem:[#allocation11 + $0xe0] sm:$0xff]
    %v1733 = vld [vmem:[#allocation11 + $0xe8] sm:$0xff]
    %v1734 = vld [vmem:[#allocation11 + $0xf0] sm:$0xff]
    %v1735 = vld [vmem:[#allocation11 + $0xf8] sm:$0xff]
    %v1736 = vlaneseq
    %v1737 = vshrl.u32 %v1736, 7
    %v1738 = vsub.s32 0, %v1737
    %v1739 = vrot.slane %v124, %v1738
    %1740 = vmatprep.subr.mxu0 0.0
    %1741 = vmatpush1.msra.mxu0 %v1704
    %1742 = vmatprep.subr.mxu0 0.0
    %1743 = vmatpush1.msra.mxu0 %v1705
    %1744 = vmatprep.subr.mxu0 0.0
    %1745 = vmatpush1.msra.mxu0 %v1706
    %1746 = vmatprep.subr.mxu0 0.0
    %1747 = vmatpush1.msra.mxu0 %v1707
    %1748 = vmatprep.subr.mxu0 0.0
    %1749 = vmatpush1.msra.mxu0 %v1708
    %1750 = vmatprep.subr.mxu0 0.0
    %1751 = vmatpush1.msra.mxu0 %v1709
    %1752 = vmatprep.subr.mxu0 0.0
    %1753 = vmatpush1.msra.mxu0 %v1710
    %1754 = vmatprep.subr.mxu0 0.0
    %1755 = vmatpush1.msra.mxu0 %v1711
    %1756 = vmatprep.subr.mxu0 0.0
    %1757 = vmatpush1.msra.mxu0 %v1712
    %1758 = vmatprep.subr.mxu0 0.0
    %1759 = vmatpush1.msra.mxu0 %v1713
    %1760 = vmatprep.subr.mxu0 0.0
    %1761 = vmatpush1.msra.mxu0 %v1714
    %1762 = vmatprep.subr.mxu0 0.0
    %1763 = vmatpush1.msra.mxu0 %v1715
    %1764 = vmatprep.subr.mxu0 0.0
    %1765 = vmatpush1.msra.mxu0 %v1716
    %1766 = vmatprep.subr.mxu0 0.0
    %1767 = vmatpush1.msra.mxu0 %v1717
    %1768 = vmatprep.subr.mxu0 0.0
    %1769 = vmatpush1.msra.mxu0 %v1718
    %1770 = vmatprep.subr.mxu0 0.0
    %1771 = vmatpush1.msra.mxu0 %v1719
    %1772 = vmatprep.subr.mxu0 0.0
    %1773 = vmatpush1.msra.mxu0 %v1720
    %1774 = vmatprep.subr.mxu0 0.0
    %1775 = vmatpush1.msra.mxu0 %v1721
    %1776 = vmatprep.subr.mxu0 0.0
    %1777 = vmatpush1.msra.mxu0 %v1722
    %1778 = vmatprep.subr.mxu0 0.0
    %1779 = vmatpush1.msra.mxu0 %v1723
    %1780 = vmatprep.subr.mxu0 0.0
    %1781 = vmatpush1.msra.mxu0 %v1724
    %1782 = vmatprep.subr.mxu0 0.0
    %1783 = vmatpush1.msra.mxu0 %v1725
    %1784 = vmatprep.subr.mxu0 0.0
    %1785 = vmatpush1.msra.mxu0 %v1726
    %1786 = vmatprep.subr.mxu0 0.0
    %1787 = vmatpush1.msra.mxu0 %v1727
    %1788 = vmatprep.subr.mxu0 0.0
    %1789 = vmatpush1.msra.mxu0 %v1728
    %1790 = vmatprep.subr.mxu0 0.0
    %1791 = vmatpush1.msra.mxu0 %v1729
    %1792 = vmatprep.subr.mxu0 0.0
    %1793 = vmatpush1.msra.mxu0 %v1730
    %1794 = vmatprep.subr.mxu0 0.0
    %1795 = vmatpush1.msra.mxu0 %v1731
    %1796 = vmatprep.subr.mxu0 0.0
    %1797 = vmatpush1.msra.mxu0 %v1732
    %1798 = vmatprep.subr.mxu0 0.0
    %1799 = vmatpush1.msra.mxu0 %v1733
    %1800 = vmatprep.subr.mxu0 0.0
    %1801 = vmatpush1.msra.mxu0 %v1734
    %1802 = vmatprep.subr.mxu0 0.0
    %1803 = vmatpush1.msra.mxu0 %v1735
    %1804 = vmatprep.mubr.f32.mxu0 %v1701
    %1805 = vmatmul.mubr.f32.gmra.mrb[0].mxu0 %v1700
    %v1806 = vpop.f32.mrb[0].mxu0
    %v1807 = vadd.f32 %v1739, %v1806
    %v1808 = vpop.f32.mrb[0].mxu0
    %1809 = vmatprep.mubr.f32.mxu0 %v1703
    %1810 = vmatmul.mubr.f32.gmra.mrb[0].mxu0 %v1702
    %v1811 = vpop.f32.mrb[0].mxu0
    %v1812 = vadd.f32 %v1739, %v1811
    %v1813 = vpop.f32.mrb[0].mxu0
    %1814 = vdwg.mxu0
    %v1815 = vadd.f32 %v1577, %v1807
    %v1816 = vadd.f32 %v1578, %v1812
    %1817 = vadd.xlane.f32.xlu0 %v1815
    %v1818 = vpop.xlane.xlu0 %1817
    %1819 = vadd.xlane.f32.xlu0 %v1816
    %v1820 = vpop.xlane.xlu0 %1819
    %v1821 = vmul.f32 %v1818, %v1512
    %v1822 = vmul.f32 %v1820, %v1512
    %v1823 = vsub.f32 %v1815, %v1821
    %v1824 = vsub.f32 %v1816, %v1822
    %v1825 = vmul.f32 %v1823, %v1823
    %v1826 = vmul.f32 %v1824, %v1824
    %1827 = vadd.xlane.f32.xlu0 %v1825
    %v1828 = vpop.xlane.xlu0 %1827
    %1829 = vadd.xlane.f32.xlu0 %v1826
    %v1830 = vpop.xlane.xlu0 %1829
    %v1831 = vmul.f32 %v1828, %v1512
    %v1832 = vmul.f32 %v1830, %v1512
    %v1833 = vadd.f32 %v1831, 1e-05
    %v1834 = vadd.f32 %v1832, 1e-05
    %v1835 = vrsqrt.pop %v1833
    %v1836 = vrsqrt.pop %v1834
    %v1837 = vmul.f32 %v1823, %v1835
    %v1838 = vmul.f32 %v1824, %v1836
    %v1839 = vlaneseq
    %v1840 = vshrl.u32 %v1839, 7
    %v1841 = vsub.s32 0, %v1840
    %v1842 = vrot.slane %v125, %v1841
    %v1843 = vmul.f32 %v1837, %v1842
    %v1844 = vmul.f32 %v1838, %v1842
    %v1845 = vlaneseq
    %v1846 = vshrl.u32 %v1845, 7
    %v1847 = vsub.s32 0, %v1846
    %v1848 = vrot.slane %v126, %v1847
    %v1849 = vadd.f32 %v1843, %v1848
    %v1850 = vadd.f32 %v1844, %v1848
    %1851 = vst [vmem:[#allocation13] sm:$0xff] %v1849
    %1852 = vst [vmem:[#allocation13 + $0x8] sm:$0xff] %v1850
    // Predicated region
    $region62: #{tpu_custom_call.1} parent=1 // pred_check
      _
    $region63: #{tpu_custom_call.1} parent=1 // pred_check_branch
      %1854 = sbr.rel (0) target = $region65
    $region64: #{tpu_custom_call.1} parent=1 // pred_region
      %s1856 = ssub.s32 256, 256
      %1857 = vsyncadd [#allocation4], %s1856
      %s1858 = sshll.u32 [#allocation13], 4
      %s1859 = int_to_ptr.vmem [resolvable:$true] %s1858
      %1864 = dma.vmem_to_hbm [thread:$0]  %s1859, 256, %s9, [#allocation4], 128, 128, 8
    $region65: #{tpu_custom_call.1} parent=1 // pred_fallthru
      _
    // Predicated region
    $region66: #{tpu_custom_call.1} parent=1 // pred_check
      _
    $region67: #{tpu_custom_call.1} parent=1 // pred_check_branch
      %1866 = sbr.rel (0) target = $region69
    $region68: #{tpu_custom_call.1} parent=1 // pred_region
      %1867 = dma.done [#allocation4], 256
    $region69: #{tpu_custom_call.1} parent=1 // pred_fallthru
      _
    %1868 = vsyncpa [#allocation3], 1
    %1869 = vsyncpa [#allocation6], 1
    %1870 = vsyncpa [#allocation9], 1
    %1871 = vsyncpa [#allocation12], 1
    %1872 = vsyncpa [#allocation4], 1

</llo_original>
